<compile_context>
chip_gen: v5e
topology: v5e:2x2
jax: 0.10.0
libtpu: 0.0.40
codegen_flags: <defaults>
</compile_context>

<pallas_src>
import functools

import jax
import jax.numpy as jnp
from jax.experimental import pallas as pl
from jax.experimental.pallas import tpu as pltpu

LANE = 128


def _round_up(v, m):
    return ((v + m - 1) // m) * m


def _pad2(a, rows, cols):
    return jnp.pad(a, ((0, rows - a.shape[0]), (0, cols - a.shape[1])))


# -----------------------------------------------------------------------------
# RGCN layer: single invocation, relation sum folded into one K = R*N matmul
# -----------------------------------------------------------------------------
def _rgcn_fused_kernel(a_ref, x_all_ref, x_dst_ref, wcat_ref, wroot_ref,
                       o_ref, m_ref):
    """One grid step per dst-row tile.

    a_ref    : (tn, R*N)   bf16  A2[dst, r*N + src]  (relation-major col blocks)
    x_all_ref: (N,  Fp)    bf16  all node features (src side, resident)
    x_dst_ref: (tn, Fp)    bf16  dst-tile node features (root / self term)
    wcat_ref : (Fp, R*Fp)  bf16  per-relation weights concatenated on lanes
    wroot_ref: (Fp, Fp)    bf16  root / self weight
    o_ref    : (tn, Fp)    bf16  relu(sum_r A_r x W_r + x_dst W_root)
    m_ref    : (R*N, Fp)   bf16  scratch: stacked per-relation (x @ W_r)
    """
    x_all = x_all_ref[...]
    # One MXU matmul for every relation's x @ W_r at once (K = Fp).
    xw = jnp.dot(x_all, wcat_ref[...], preferred_element_type=jnp.float32)
    xw = xw.astype(jnp.bfloat16)                       # (N, R*Fp)

    n = x_all.shape[0]
    fp = wroot_ref.shape[1]
    n_rel = wcat_ref.shape[1] // fp
    # Re-stack lane blocks as row blocks (aligned 128-lane copies, R is small)
    # so the relation reduction becomes a single K = R*N matmul below.
    for r in range(n_rel):
        m_ref[r * n:(r + 1) * n, :] = xw[:, r * fp:(r + 1) * fp]

    acc = jnp.dot(a_ref[...], m_ref[...], preferred_element_type=jnp.float32)
    acc = acc + jnp.dot(x_dst_ref[...], wroot_ref[...],
                        preferred_element_type=jnp.float32)
    # F.relu applied after each conv in DDI_decagon_prob.forward -> fused here.
    o_ref[...] = jnp.maximum(acc, 0.0).astype(o_ref.dtype)


def rgcn_layer(A2, x_p, Wcat, Wroot_p):
    """A2: [N, R*N] bf16, x_p: [N, Fp] bf16, Wcat: [Fp, R*Fp], Wroot_p: [Fp, Fp]."""
    N, Fp = x_p.shape
    RN = A2.shape[1]
    RF = Wcat.shape[1]
    # dst-row tiling: single tile at demo shapes; tiles at scale so the
    # "parallel" axis can be sharded across the two v7x TensorCores.
    tn = 256 if (N > 256 and N % 256 == 0) else N
    grid = (N // tn,)
    return pl.pallas_call(
        _rgcn_fused_kernel,
        out_shape=jax.ShapeDtypeStruct((N, Fp), jnp.bfloat16),
        grid_spec=pltpu.PrefetchScalarGridSpec(
            num_scalar_prefetch=0,
            grid=grid,
            in_specs=[
                pl.BlockSpec((tn, RN), lambda i: (i, 0)),   # A2 dst tile
                pl.BlockSpec((N, Fp), lambda i: (0, 0)),    # x (all src rows)
                pl.BlockSpec((tn, Fp), lambda i: (i, 0)),   # x dst rows (root)
                pl.BlockSpec((Fp, RF), lambda i: (0, 0)),   # W concat (resident)
                pl.BlockSpec((Fp, Fp), lambda i: (0, 0)),   # W root (resident)
            ],
            out_specs=pl.BlockSpec((tn, Fp), lambda i: (i, 0)),
            scratch_shapes=[pltpu.VMEM((RN, Fp), jnp.bfloat16)],
        ),
        compiler_params=pltpu.CompilerParams(
            dimension_semantics=("parallel",)),
    )(A2, x_p, x_p, Wcat, Wroot_p)


# -----------------------------------------------------------------------------
# DEDICOM decoder: score[r, e] = x1[e] diag(D_r) R diag(D_r) x2[e]^T, sigmoid
# -----------------------------------------------------------------------------
def _dedicom_kernel(x1t_ref, x2t_ref, mt_ref, o_ref):
    """One grid step per edge tile (E on lanes).

    x1t_ref: (Hp, TE)     bf16  endpoint-0 embeddings, transposed
    x2t_ref: (Hp, TE)     bf16  endpoint-1 embeddings, transposed
    mt_ref : (R, Hp, Hp)  bf16  Mt[r] = diag(D_r) R^T diag(D_r)  (precomputed)
    o_ref  : (R, TE)      f32   sigmoid scores, relation-major (lane-dense)
    """
    x1t = x1t_ref[...]
    x2t = x2t_ref[...].astype(jnp.float32)
    n_rel = mt_ref.shape[0]
    for r in range(n_rel):                      # R is small; static unroll
        u = jnp.dot(mt_ref[r], x1t, preferred_element_type=jnp.float32)  # (Hp,TE)
        s = jnp.sum(u * x2t, axis=0, keepdims=True)                      # (1, TE)
        o_ref[r:r + 1, :] = jax.nn.sigmoid(s).astype(o_ref.dtype)


def dedicom_decoder(x1t, x2t, Mt, n_edges):
    Hp, Ep = x1t.shape
    R = Mt.shape[0]
    TE = LANE
    out = pl.pallas_call(
        _dedicom_kernel,
        out_shape=jax.ShapeDtypeStruct((R, Ep), jnp.float32),
        grid_spec=pltpu.PrefetchScalarGridSpec(
            num_scalar_prefetch=0,
            grid=(Ep // TE,),
            in_specs=[
                pl.BlockSpec((Hp, TE), lambda i: (0, i)),
                pl.BlockSpec((Hp, TE), lambda i: (0, i)),
                pl.BlockSpec((R, Hp, Hp), lambda i: (0, 0, 0)),
            ],
            out_specs=pl.BlockSpec((R, TE), lambda i: (0, i)),
        ),
        compiler_params=pltpu.CompilerParams(
            dimension_semantics=("parallel",)),
    )(x1t, x2t, Mt)
    return out[:, :n_edges].T                   # [E, R], layout plumbing in XLA


# -----------------------------------------------------------------------------
# Model glue (parameter setup, edge -> dense adjacency, padding, gathers)
# -----------------------------------------------------------------------------
def init_params(key, in_dim, hidden_dim, out_dim, basis):
    ks = jax.random.split(key, 9)
    return {
        "probs": jax.random.normal(ks[0], (out_dim,), jnp.float32),
        "conv1_basis": jax.random.normal(ks[1], (basis, in_dim, hidden_dim), jnp.float32)
        * (1.0 / jnp.sqrt(in_dim)),
        "conv1_comp": jax.random.normal(ks[2], (out_dim, basis), jnp.float32),
        "conv1_root": jax.random.normal(ks[3], (in_dim, hidden_dim), jnp.float32)
        * (1.0 / jnp.sqrt(in_dim)),
        "conv2_basis": jax.random.normal(ks[4], (basis, hidden_dim, hidden_dim), jnp.float32)
        * (1.0 / jnp.sqrt(hidden_dim)),
        "conv2_comp": jax.random.normal(ks[5], (out_dim, basis), jnp.float32),
        "conv2_root": jax.random.normal(ks[6], (hidden_dim, hidden_dim), jnp.float32)
        * (1.0 / jnp.sqrt(hidden_dim)),
        "R": jax.random.normal(ks[7], (hidden_dim, hidden_dim), jnp.float32),
        "D": jax.random.normal(ks[8], (out_dim, hidden_dim), jnp.float32),
    }


@functools.partial(jax.jit, static_argnames=("num_nodes",))
def ddi_decagon_prob_forward(params, x, edge_index, edge_attr, target_edge_index,
                             num_nodes):
    N = num_nodes
    Rrel = params["probs"].shape[0]
    Fin = x.shape[1]
    H = params["conv1_root"].shape[1]
    Fin_p = _round_up(max(Fin, LANE), LANE)
    H_p = _round_up(max(H, LANE), LANE)

    # Dropout(p=0.1) layers -> identity (eval mode).
    # torch.nonzero(edge_attr) + index_select(edge_index) expressed as dense
    # per-relation adjacency (messages flow src -> dst, aggregated at dst).
    src, dst = edge_index[0], edge_index[1]
    mask = (edge_attr != 0).astype(jnp.float32)                 # [E_all, R]
    A = jnp.zeros((Rrel, N, N), jnp.float32)
    A = A.at[:, dst, src].add(mask.T)
    # TODO(synk): RGCNConv_prob normalization is not shown in the reference;
    # mean aggregation over incoming edges per relation is used here.
    deg = jnp.sum(A, axis=2, keepdims=True)
    A = A / jnp.maximum(deg, 1.0)
    # Lay out as A2[dst, r*N + src] so the relation sum is one K=R*N matmul.
    A2 = jnp.transpose(A, (1, 0, 2)).reshape(N, Rrel * N).astype(jnp.bfloat16)

    # TODO(synk): exact use of `probs` inside RGCNConv_prob is not shown;
    # per-relation messages are scaled by sigmoid(probs[r]).
    scale = jax.nn.sigmoid(params["probs"])

    def weight_cat(basis, comp, fin_p, fout_p):
        W = jnp.einsum("rb,bio->rio", comp, basis) * scale[:, None, None]
        W = jnp.pad(W, ((0, 0), (0, fin_p - W.shape[1]), (0, fout_p - W.shape[2])))
        return (jnp.transpose(W, (1, 0, 2))
                .reshape(fin_p, Rrel * fout_p).astype(jnp.bfloat16))

    x_p = _pad2(x.astype(jnp.float32), N, Fin_p).astype(jnp.bfloat16)

    # conv1 + ReLU (fused into kernel epilogue)
    W1 = weight_cat(params["conv1_basis"], params["conv1_comp"], Fin_p, H_p)
    Wr1 = _pad2(params["conv1_root"], Fin_p, H_p).astype(jnp.bfloat16)
    h = rgcn_layer(A2, x_p, W1, Wr1)                            # [N, H_p] bf16

    # conv2 + ReLU
    W2 = weight_cat(params["conv2_basis"], params["conv2_comp"], H_p, H_p)
    Wr2 = _pad2(params["conv2_root"], H_p, H_p).astype(jnp.bfloat16)
    h = rgcn_layer(A2, h, W2, Wr2)                              # [N, H_p] bf16

    # Decoder: gather endpoint embeddings (XLA glue), DEDICOM score in Pallas.
    # TODO(synk): for large E_tgt, fuse this gather into the decoder kernel via
    # scalar-prefetched indices instead of materializing x1/x2 in HBM.
    E = target_edge_index.shape[1]
    TE = LANE
    E_p = _round_up(max(E, TE), TE)
    x1 = h[target_edge_index[0]]                                # [E, H_p] bf16
    x2 = h[target_edge_index[1]]
    x1t = jnp.pad(x1, ((0, E_p - E), (0, 0))).T                 # [H_p, E_p]
    x2t = jnp.pad(x2, ((0, E_p - E), (0, 0))).T
    D_p = _pad2(params["D"], Rrel, H_p)                         # [R, H_p]
    Rm_p = _pad2(params["R"], H_p, H_p)                         # [H_p, H_p]
    # Mt[r] = diag(D_r) R^T diag(D_r): precomputed so the kernel is just
    # batched (Mt[r] @ x1^T) ⊙ x2^T column sums.
    Mt = (D_p[:, :, None] * jnp.transpose(Rm_p)[None, :, :]
          * D_p[:, None, :]).astype(jnp.bfloat16)               # [R, H_p, H_p]
    return dedicom_decoder(x1t, x2t, Mt, E)                     # [E, R] f32


# -----------------------------------------------------------------------------
# Demo
# -----------------------------------------------------------------------------
if __name__ == "__main__":
    key = jax.random.PRNGKey(0)
    k_par, k_x, k_ei, k_et, k_tgt = jax.random.split(key, 5)

    # Small, forward-consistent shapes.
    N = 64            # number of nodes
    IN_DIM = 32
    HIDDEN = 32
    OUT_DIM = 8       # number of relation types
    BASIS = 4
    E_ALL = 128       # candidate edges
    E_TGT = 16        # target edges to score

    params = init_params(k_par, IN_DIM, HIDDEN, OUT_DIM, BASIS)

    x = jax.random.normal(k_x, (N, IN_DIM), jnp.float32)
    edge_index = jax.random.randint(k_ei, (2, E_ALL), 0, N, jnp.int32)
    edge_type = jax.random.randint(k_et, (E_ALL,), 0, OUT_DIM, jnp.int32)
    edge_attr = jax.nn.one_hot(edge_type, OUT_DIM, dtype=jnp.float32)  # [E_ALL, R]
    target_edge_index = jax.random.randint(k_tgt, (2, E_TGT), 0, N, jnp.int32)

    out = ddi_decagon_prob_forward(
        params, x, edge_index, edge_attr, target_edge_index, num_nodes=N
    )
    out = jax.block_until_ready(out)

    assert out.shape == (E_TGT, OUT_DIM), out.shape
    assert bool(jnp.all(jnp.isfinite(out)))
    assert bool(jnp.all((out >= 0.0) & (out <= 1.0)))
    print("KERNEL_OK")
</pallas_src>

<mosaic_0001>
module attributes {stable_mosaic.version = 11 : i64} {
  func.func @_rgcn_fused_kernel(%arg0: i32, %arg1: memref<64x512xbf16, #tpu.memory_space<vmem>>, %arg2: memref<64x128xbf16, #tpu.memory_space<vmem>>, %arg3: memref<64x128xbf16, #tpu.memory_space<vmem>>, %arg4: memref<128x1024xbf16, #tpu.memory_space<vmem>>, %arg5: memref<128x128xbf16, #tpu.memory_space<vmem>>, %arg6: memref<64x128xbf16, #tpu.memory_space<vmem>>, %arg7: memref<512x128xbf16, #tpu.memory_space<vmem>>) attributes {dimension_semantics = [#tpu.dimension_semantics<parallel>], iteration_bounds = array<i64: 1>, scalar_prefetch = 0 : i64, scratch_operands = 1 : i64, tpu.core_type = #tpu.core_type<tc>, window_params = [{transform_indices = @transform_0, window_bounds = array<i64: 64, 512>}, {pipeline_mode = #tpu.pipeline_mode<synchronous>, transform_indices = @transform_1, window_bounds = array<i64: 64, 128>}, {transform_indices = @transform_2, window_bounds = array<i64: 64, 128>}, {pipeline_mode = #tpu.pipeline_mode<synchronous>, transform_indices = @transform_3, window_bounds = array<i64: 128, 1024>}, {pipeline_mode = #tpu.pipeline_mode<synchronous>, transform_indices = @transform_4, window_bounds = array<i64: 128, 128>}, {transform_indices = @transform_5, window_bounds = array<i64: 64, 128>}]} {
    %c0 = arith.constant 0 : index
    %c0_0 = arith.constant 0 : index
    %0 = vector.load %arg2[%c0, %c0_0] : memref<64x128xbf16, #tpu.memory_space<vmem>>, vector<64x128xbf16>
    %c0_1 = arith.constant 0 : index
    %c0_2 = arith.constant 0 : index
    %1 = vector.load %arg4[%c0_1, %c0_2] : memref<128x1024xbf16, #tpu.memory_space<vmem>>, vector<128x1024xbf16>
    %cst = arith.constant dense<0.000000e+00> : vector<64x1024xf32>
    %2 = tpu.matmul %0, %1, %cst {dimension_numbers = #tpu.dot_dimension_numbers<[1], [0], [0], [1], [0, 0, 1, 1], [], []>} : vector<64x128xbf16>, vector<128x1024xbf16>, vector<64x1024xf32> -> vector<64x1024xf32>
    %3 = arith.truncf %2 : vector<64x1024xf32> to vector<64x1024xbf16>
    %4 = vector.extract_strided_slice %3 {offsets = [0, 0], sizes = [64, 128], strides = [1, 1]} : vector<64x1024xbf16> to vector<64x128xbf16>
    %c0_3 = arith.constant 0 : index
    %c0_4 = arith.constant 0 : index
    %5 = vector.load %arg7[%c0_3, %c0_4] : memref<512x128xbf16, #tpu.memory_space<vmem>>, vector<64x128xbf16>
    tpu.vector_store %arg7[%c0_3, %c0_4], %4 {strides = array<i32>} : memref<512x128xbf16, #tpu.memory_space<vmem>>, vector<64x128xbf16>,
    %6 = vector.extract_strided_slice %3 {offsets = [0, 128], sizes = [64, 128], strides = [1, 1]} : vector<64x1024xbf16> to vector<64x128xbf16>
    %c64 = arith.constant 64 : index
    %c0_5 = arith.constant 0 : index
    %7 = vector.load %arg7[%c64, %c0_5] : memref<512x128xbf16, #tpu.memory_space<vmem>>, vector<64x128xbf16>
    tpu.vector_store %arg7[%c64, %c0_5], %6 {strides = array<i32>} : memref<512x128xbf16, #tpu.memory_space<vmem>>, vector<64x128xbf16>,
    %8 = vector.extract_strided_slice %3 {offsets = [0, 256], sizes = [64, 128], strides = [1, 1]} : vector<64x1024xbf16> to vector<64x128xbf16>
    %c128 = arith.constant 128 : index
    %c0_6 = arith.constant 0 : index
    %9 = vector.load %arg7[%c128, %c0_6] : memref<512x128xbf16, #tpu.memory_space<vmem>>, vector<64x128xbf16>
    tpu.vector_store %arg7[%c128, %c0_6], %8 {strides = array<i32>} : memref<512x128xbf16, #tpu.memory_space<vmem>>, vector<64x128xbf16>,
    %10 = vector.extract_strided_slice %3 {offsets = [0, 384], sizes = [64, 128], strides = [1, 1]} : vector<64x1024xbf16> to vector<64x128xbf16>
    %c192 = arith.constant 192 : index
    %c0_7 = arith.constant 0 : index
    %11 = vector.load %arg7[%c192, %c0_7] : memref<512x128xbf16, #tpu.memory_space<vmem>>, vector<64x128xbf16>
    tpu.vector_store %arg7[%c192, %c0_7], %10 {strides = array<i32>} : memref<512x128xbf16, #tpu.memory_space<vmem>>, vector<64x128xbf16>,
    %12 = vector.extract_strided_slice %3 {offsets = [0, 512], sizes = [64, 128], strides = [1, 1]} : vector<64x1024xbf16> to vector<64x128xbf16>
    %c256 = arith.constant 256 : index
    %c0_8 = arith.constant 0 : index
    %13 = vector.load %arg7[%c256, %c0_8] : memref<512x128xbf16, #tpu.memory_space<vmem>>, vector<64x128xbf16>
    tpu.vector_store %arg7[%c256, %c0_8], %12 {strides = array<i32>} : memref<512x128xbf16, #tpu.memory_space<vmem>>, vector<64x128xbf16>,
    %14 = vector.extract_strided_slice %3 {offsets = [0, 640], sizes = [64, 128], strides = [1, 1]} : vector<64x1024xbf16> to vector<64x128xbf16>
    %c320 = arith.constant 320 : index
    %c0_9 = arith.constant 0 : index
    %15 = vector.load %arg7[%c320, %c0_9] : memref<512x128xbf16, #tpu.memory_space<vmem>>, vector<64x128xbf16>
    tpu.vector_store %arg7[%c320, %c0_9], %14 {strides = array<i32>} : memref<512x128xbf16, #tpu.memory_space<vmem>>, vector<64x128xbf16>,
    %16 = vector.extract_strided_slice %3 {offsets = [0, 768], sizes = [64, 128], strides = [1, 1]} : vector<64x1024xbf16> to vector<64x128xbf16>
    %c384 = arith.constant 384 : index
    %c0_10 = arith.constant 0 : index
    %17 = vector.load %arg7[%c384, %c0_10] : memref<512x128xbf16, #tpu.memory_space<vmem>>, vector<64x128xbf16>
    tpu.vector_store %arg7[%c384, %c0_10], %16 {strides = array<i32>} : memref<512x128xbf16, #tpu.memory_space<vmem>>, vector<64x128xbf16>,
    %18 = vector.extract_strided_slice %3 {offsets = [0, 896], sizes = [64, 128], strides = [1, 1]} : vector<64x1024xbf16> to vector<64x128xbf16>
    %c448 = arith.constant 448 : index
    %c0_11 = arith.constant 0 : index
    %19 = vector.load %arg7[%c448, %c0_11] : memref<512x128xbf16, #tpu.memory_space<vmem>>, vector<64x128xbf16>
    tpu.vector_store %arg7[%c448, %c0_11], %18 {strides = array<i32>} : memref<512x128xbf16, #tpu.memory_space<vmem>>, vector<64x128xbf16>,
    %c0_12 = arith.constant 0 : index
    %c0_13 = arith.constant 0 : index
    %20 = vector.load %arg1[%c0_12, %c0_13] : memref<64x512xbf16, #tpu.memory_space<vmem>>, vector<64x512xbf16>
    %c0_14 = arith.constant 0 : index
    %c0_15 = arith.constant 0 : index
    %21 = vector.load %arg7[%c0_14, %c0_15] : memref<512x128xbf16, #tpu.memory_space<vmem>>, vector<512x128xbf16>
    %cst_16 = arith.constant dense<0.000000e+00> : vector<64x128xf32>
    %22 = tpu.matmul %20, %21, %cst_16 {dimension_numbers = #tpu.dot_dimension_numbers<[1], [0], [0], [1], [0, 0, 1, 1], [], []>} : vector<64x512xbf16>, vector<512x128xbf16>, vector<64x128xf32> -> vector<64x128xf32>
    %c0_17 = arith.constant 0 : index
    %c0_18 = arith.constant 0 : index
    %23 = vector.load %arg3[%c0_17, %c0_18] : memref<64x128xbf16, #tpu.memory_space<vmem>>, vector<64x128xbf16>
    %c0_19 = arith.constant 0 : index
    %c0_20 = arith.constant 0 : index
    %24 = vector.load %arg5[%c0_19, %c0_20] : memref<128x128xbf16, #tpu.memory_space<vmem>>, vector<128x128xbf16>
    %cst_21 = arith.constant dense<0.000000e+00> : vector<64x128xf32>
    %25 = tpu.matmul %23, %24, %cst_21 {dimension_numbers = #tpu.dot_dimension_numbers<[1], [0], [0], [1], [0, 0, 1, 1], [], []>} : vector<64x128xbf16>, vector<128x128xbf16>, vector<64x128xf32> -> vector<64x128xf32>
    %26 = arith.addf %22, %25 : vector<64x128xf32>
    %cst_22 = arith.constant 0.000000e+00 : f32
    %27 = vector.broadcast %cst_22 : f32 to vector<64x128xf32>
    %28 = arith.maximumf %26, %27 : vector<64x128xf32>
    %29 = arith.truncf %28 : vector<64x128xf32> to vector<64x128xbf16>
    %c0_23 = arith.constant 0 : index
    %c0_24 = arith.constant 0 : index
    %30 = vector.load %arg6[%c0_23, %c0_24] : memref<64x128xbf16, #tpu.memory_space<vmem>>, vector<64x128xbf16>
    tpu.vector_store %arg6[%c0_23, %c0_24], %29 {strides = array<i32>} : memref<64x128xbf16, #tpu.memory_space<vmem>>, vector<64x128xbf16>,
    return
  }
  func.func @transform_0(%arg0: i32) -> (i32, i32) {
    %c0_i32 = arith.constant 0 : i32
    %c0_i32_0 = arith.constant 0 : i32
    return %arg0, %c0_i32 : i32, i32
  }
  func.func @transform_1(%arg0: i32) -> (i32, i32) {
    %c0_i32 = arith.constant 0 : i32
    %c0_i32_0 = arith.constant 0 : i32
    %c0_i32_1 = arith.constant 0 : i32
    return %c0_i32, %c0_i32_0 : i32, i32
  }
  func.func @transform_2(%arg0: i32) -> (i32, i32) {
    %c0_i32 = arith.constant 0 : i32
    %c0_i32_0 = arith.constant 0 : i32
    return %arg0, %c0_i32 : i32, i32
  }
  func.func @transform_3(%arg0: i32) -> (i32, i32) {
    %c0_i32 = arith.constant 0 : i32
    %c0_i32_0 = arith.constant 0 : i32
    %c0_i32_1 = arith.constant 0 : i32
    return %c0_i32, %c0_i32_0 : i32, i32
  }
  func.func @transform_4(%arg0: i32) -> (i32, i32) {
    %c0_i32 = arith.constant 0 : i32
    %c0_i32_0 = arith.constant 0 : i32
    %c0_i32_1 = arith.constant 0 : i32
    return %c0_i32, %c0_i32_0 : i32, i32
  }
  func.func @transform_5(%arg0: i32) -> (i32, i32) {
    %c0_i32 = arith.constant 0 : i32
    %c0_i32_0 = arith.constant 0 : i32
    return %arg0, %c0_i32 : i32, i32
  }
}

module attributes {stable_mosaic.version = 11 : i64} {
  func.func @_dedicom_kernel(%arg0: i32, %arg1: memref<128x128xbf16, #tpu.memory_space<vmem>>, %arg2: memref<128x128xbf16, #tpu.memory_space<vmem>>, %arg3: memref<8x128x128xbf16, #tpu.memory_space<vmem>>, %arg4: memref<8x128xf32, #tpu.memory_space<vmem>>) attributes {dimension_semantics = [#tpu.dimension_semantics<parallel>], iteration_bounds = array<i64: 1>, scalar_prefetch = 0 : i64, scratch_operands = 0 : i64, tpu.core_type = #tpu.core_type<tc>, window_params = [{transform_indices = @transform_0, window_bounds = array<i64: 128, 128>}, {transform_indices = @transform_1, window_bounds = array<i64: 128, 128>}, {pipeline_mode = #tpu.pipeline_mode<synchronous>, transform_indices = @transform_2, window_bounds = array<i64: 8, 128, 128>}, {transform_indices = @transform_3, window_bounds = array<i64: 8, 128>}]} {
    %c0 = arith.constant 0 : index
    %c0_0 = arith.constant 0 : index
    %0 = vector.load %arg1[%c0, %c0_0] : memref<128x128xbf16, #tpu.memory_space<vmem>>, vector<128x128xbf16>
    %c0_1 = arith.constant 0 : index
    %c0_2 = arith.constant 0 : index
    %1 = vector.load %arg2[%c0_1, %c0_2] : memref<128x128xbf16, #tpu.memory_space<vmem>>, vector<128x128xbf16>
    %2 = arith.extf %1 : vector<128x128xbf16> to vector<128x128xf32>
    %c0_3 = arith.constant 0 : index
    %c0_4 = arith.constant 0 : index
    %c0_5 = arith.constant 0 : index
    %3 = vector.load %arg3[%c0_3, %c0_4, %c0_5] : memref<8x128x128xbf16, #tpu.memory_space<vmem>>, vector<1x128x128xbf16>
    %4 = vector.shape_cast %3 : vector<1x128x128xbf16> to vector<128x128xbf16>
    %cst = arith.constant dense<0.000000e+00> : vector<128x128xf32>
    %5 = tpu.matmul %4, %0, %cst {dimension_numbers = #tpu.dot_dimension_numbers<[1], [0], [0], [1], [0, 0, 1, 1], [], []>} : vector<128x128xbf16>, vector<128x128xbf16>, vector<128x128xf32> -> vector<128x128xf32>
    %6 = arith.mulf %5, %2 : vector<128x128xf32>
    %cst_6 = arith.constant dense<0.000000e+00> : vector<128xf32>
    %7 = vector.multi_reduction <add>, %6, %cst_6 [0] : vector<128x128xf32> to vector<128xf32>
    %8 = vector.shape_cast %7 : vector<128xf32> to vector<1x128xf32>
    %9 = arith.negf %8 : vector<1x128xf32>
    %10 = math.exp %9 : vector<1x128xf32>
    %cst_7 = arith.constant 1.000000e+00 : f32
    %11 = vector.broadcast %cst_7 : f32 to vector<1x128xf32>
    %12 = arith.addf %11, %10 : vector<1x128xf32>
    %13 = arith.divf %11, %12 : vector<1x128xf32>
    %c0_8 = arith.constant 0 : index
    %c0_9 = arith.constant 0 : index
    %14 = vector.load %arg4[%c0_8, %c0_9] : memref<8x128xf32, #tpu.memory_space<vmem>>, vector<1x128xf32>
    tpu.vector_store %arg4[%c0_8, %c0_9], %13 {strides = array<i32>} : memref<8x128xf32, #tpu.memory_space<vmem>>, vector<1x128xf32>,
    %c1 = arith.constant 1 : index
    %c0_10 = arith.constant 0 : index
    %c0_11 = arith.constant 0 : index
    %15 = vector.load %arg3[%c1, %c0_10, %c0_11] : memref<8x128x128xbf16, #tpu.memory_space<vmem>>, vector<1x128x128xbf16>
    %16 = vector.shape_cast %15 : vector<1x128x128xbf16> to vector<128x128xbf16>
    %cst_12 = arith.constant dense<0.000000e+00> : vector<128x128xf32>
    %17 = tpu.matmul %16, %0, %cst_12 {dimension_numbers = #tpu.dot_dimension_numbers<[1], [0], [0], [1], [0, 0, 1, 1], [], []>} : vector<128x128xbf16>, vector<128x128xbf16>, vector<128x128xf32> -> vector<128x128xf32>
    %18 = arith.mulf %17, %2 : vector<128x128xf32>
    %cst_13 = arith.constant dense<0.000000e+00> : vector<128xf32>
    %19 = vector.multi_reduction <add>, %18, %cst_13 [0] : vector<128x128xf32> to vector<128xf32>
    %20 = vector.shape_cast %19 : vector<128xf32> to vector<1x128xf32>
    %21 = arith.negf %20 : vector<1x128xf32>
    %22 = math.exp %21 : vector<1x128xf32>
    %cst_14 = arith.constant 1.000000e+00 : f32
    %23 = vector.broadcast %cst_14 : f32 to vector<1x128xf32>
    %24 = arith.addf %23, %22 : vector<1x128xf32>
    %25 = arith.divf %23, %24 : vector<1x128xf32>
    %c1_15 = arith.constant 1 : index
    %c0_16 = arith.constant 0 : index
    %26 = vector.load %arg4[%c1_15, %c0_16] : memref<8x128xf32, #tpu.memory_space<vmem>>, vector<1x128xf32>
    tpu.vector_store %arg4[%c1_15, %c0_16], %25 {strides = array<i32>} : memref<8x128xf32, #tpu.memory_space<vmem>>, vector<1x128xf32>,
    %c2 = arith.constant 2 : index
    %c0_17 = arith.constant 0 : index
    %c0_18 = arith.constant 0 : index
    %27 = vector.load %arg3[%c2, %c0_17, %c0_18] : memref<8x128x128xbf16, #tpu.memory_space<vmem>>, vector<1x128x128xbf16>
    %28 = vector.shape_cast %27 : vector<1x128x128xbf16> to vector<128x128xbf16>
    %cst_19 = arith.constant dense<0.000000e+00> : vector<128x128xf32>
    %29 = tpu.matmul %28, %0, %cst_19 {dimension_numbers = #tpu.dot_dimension_numbers<[1], [0], [0], [1], [0, 0, 1, 1], [], []>} : vector<128x128xbf16>, vector<128x128xbf16>, vector<128x128xf32> -> vector<128x128xf32>
    %30 = arith.mulf %29, %2 : vector<128x128xf32>
    %cst_20 = arith.constant dense<0.000000e+00> : vector<128xf32>
    %31 = vector.multi_reduction <add>, %30, %cst_20 [0] : vector<128x128xf32> to vector<128xf32>
    %32 = vector.shape_cast %31 : vector<128xf32> to vector<1x128xf32>
    %33 = arith.negf %32 : vector<1x128xf32>
    %34 = math.exp %33 : vector<1x128xf32>
    %cst_21 = arith.constant 1.000000e+00 : f32
    %35 = vector.broadcast %cst_21 : f32 to vector<1x128xf32>
    %36 = arith.addf %35, %34 : vector<1x128xf32>
    %37 = arith.divf %35, %36 : vector<1x128xf32>
    %c2_22 = arith.constant 2 : index
    %c0_23 = arith.constant 0 : index
    %38 = vector.load %arg4[%c2_22, %c0_23] : memref<8x128xf32, #tpu.memory_space<vmem>>, vector<1x128xf32>
    tpu.vector_store %arg4[%c2_22, %c0_23], %37 {strides = array<i32>} : memref<8x128xf32, #tpu.memory_space<vmem>>, vector<1x128xf32>,
    %c3 = arith.constant 3 : index
    %c0_24 = arith.constant 0 : index
    %c0_25 = arith.constant 0 : index
    %39 = vector.load %arg3[%c3, %c0_24, %c0_25] : memref<8x128x128xbf16, #tpu.memory_space<vmem>>, vector<1x128x128xbf16>
    %40 = vector.shape_cast %39 : vector<1x128x128xbf16> to vector<128x128xbf16>
    %cst_26 = arith.constant dense<0.000000e+00> : vector<128x128xf32>
    %41 = tpu.matmul %40, %0, %cst_26 {dimension_numbers = #tpu.dot_dimension_numbers<[1], [0], [0], [1], [0, 0, 1, 1], [], []>} : vector<128x128xbf16>, vector<128x128xbf16>, vector<128x128xf32> -> vector<128x128xf32>
    %42 = arith.mulf %41, %2 : vector<128x128xf32>
    %cst_27 = arith.constant dense<0.000000e+00> : vector<128xf32>
    %43 = vector.multi_reduction <add>, %42, %cst_27 [0] : vector<128x128xf32> to vector<128xf32>
    %44 = vector.shape_cast %43 : vector<128xf32> to vector<1x128xf32>
    %45 = arith.negf %44 : vector<1x128xf32>
    %46 = math.exp %45 : vector<1x128xf32>
    %cst_28 = arith.constant 1.000000e+00 : f32
    %47 = vector.broadcast %cst_28 : f32 to vector<1x128xf32>
    %48 = arith.addf %47, %46 : vector<1x128xf32>
    %49 = arith.divf %47, %48 : vector<1x128xf32>
    %c3_29 = arith.constant 3 : index
    %c0_30 = arith.constant 0 : index
    %50 = vector.load %arg4[%c3_29, %c0_30] : memref<8x128xf32, #tpu.memory_space<vmem>>, vector<1x128xf32>
    tpu.vector_store %arg4[%c3_29, %c0_30], %49 {strides = array<i32>} : memref<8x128xf32, #tpu.memory_space<vmem>>, vector<1x128xf32>,
    %c4 = arith.constant 4 : index
    %c0_31 = arith.constant 0 : index
    %c0_32 = arith.constant 0 : index
    %51 = vector.load %arg3[%c4, %c0_31, %c0_32] : memref<8x128x128xbf16, #tpu.memory_space<vmem>>, vector<1x128x128xbf16>
    %52 = vector.shape_cast %51 : vector<1x128x128xbf16> to vector<128x128xbf16>
    %cst_33 = arith.constant dense<0.000000e+00> : vector<128x128xf32>
    %53 = tpu.matmul %52, %0, %cst_33 {dimension_numbers = #tpu.dot_dimension_numbers<[1], [0], [0], [1], [0, 0, 1, 1], [], []>} : vector<128x128xbf16>, vector<128x128xbf16>, vector<128x128xf32> -> vector<128x128xf32>
    %54 = arith.mulf %53, %2 : vector<128x128xf32>
    %cst_34 = arith.constant dense<0.000000e+00> : vector<128xf32>
    %55 = vector.multi_reduction <add>, %54, %cst_34 [0] : vector<128x128xf32> to vector<128xf32>
    %56 = vector.shape_cast %55 : vector<128xf32> to vector<1x128xf32>
    %57 = arith.negf %56 : vector<1x128xf32>
    %58 = math.exp %57 : vector<1x128xf32>
    %cst_35 = arith.constant 1.000000e+00 : f32
    %59 = vector.broadcast %cst_35 : f32 to vector<1x128xf32>
    %60 = arith.addf %59, %58 : vector<1x128xf32>
    %61 = arith.divf %59, %60 : vector<1x128xf32>
    %c4_36 = arith.constant 4 : index
    %c0_37 = arith.constant 0 : index
    %62 = vector.load %arg4[%c4_36, %c0_37] : memref<8x128xf32, #tpu.memory_space<vmem>>, vector<1x128xf32>
    tpu.vector_store %arg4[%c4_36, %c0_37], %61 {strides = array<i32>} : memref<8x128xf32, #tpu.memory_space<vmem>>, vector<1x128xf32>,
    %c5 = arith.constant 5 : index
    %c0_38 = arith.constant 0 : index
    %c0_39 = arith.constant 0 : index
    %63 = vector.load %arg3[%c5, %c0_38, %c0_39] : memref<8x128x128xbf16, #tpu.memory_space<vmem>>, vector<1x128x128xbf16>
    %64 = vector.shape_cast %63 : vector<1x128x128xbf16> to vector<128x128xbf16>
    %cst_40 = arith.constant dense<0.000000e+00> : vector<128x128xf32>
    %65 = tpu.matmul %64, %0, %cst_40 {dimension_numbers = #tpu.dot_dimension_numbers<[1], [0], [0], [1], [0, 0, 1, 1], [], []>} : vector<128x128xbf16>, vector<128x128xbf16>, vector<128x128xf32> -> vector<128x128xf32>
    %66 = arith.mulf %65, %2 : vector<128x128xf32>
    %cst_41 = arith.constant dense<0.000000e+00> : vector<128xf32>
    %67 = vector.multi_reduction <add>, %66, %cst_41 [0] : vector<128x128xf32> to vector<128xf32>
    %68 = vector.shape_cast %67 : vector<128xf32> to vector<1x128xf32>
    %69 = arith.negf %68 : vector<1x128xf32>
    %70 = math.exp %69 : vector<1x128xf32>
    %cst_42 = arith.constant 1.000000e+00 : f32
    %71 = vector.broadcast %cst_42 : f32 to vector<1x128xf32>
    %72 = arith.addf %71, %70 : vector<1x128xf32>
    %73 = arith.divf %71, %72 : vector<1x128xf32>
    %c5_43 = arith.constant 5 : index
    %c0_44 = arith.constant 0 : index
    %74 = vector.load %arg4[%c5_43, %c0_44] : memref<8x128xf32, #tpu.memory_space<vmem>>, vector<1x128xf32>
    tpu.vector_store %arg4[%c5_43, %c0_44], %73 {strides = array<i32>} : memref<8x128xf32, #tpu.memory_space<vmem>>, vector<1x128xf32>,
    %c6 = arith.constant 6 : index
    %c0_45 = arith.constant 0 : index
    %c0_46 = arith.constant 0 : index
    %75 = vector.load %arg3[%c6, %c0_45, %c0_46] : memref<8x128x128xbf16, #tpu.memory_space<vmem>>, vector<1x128x128xbf16>
    %76 = vector.shape_cast %75 : vector<1x128x128xbf16> to vector<128x128xbf16>
    %cst_47 = arith.constant dense<0.000000e+00> : vector<128x128xf32>
    %77 = tpu.matmul %76, %0, %cst_47 {dimension_numbers = #tpu.dot_dimension_numbers<[1], [0], [0], [1], [0, 0, 1, 1], [], []>} : vector<128x128xbf16>, vector<128x128xbf16>, vector<128x128xf32> -> vector<128x128xf32>
    %78 = arith.mulf %77, %2 : vector<128x128xf32>
    %cst_48 = arith.constant dense<0.000000e+00> : vector<128xf32>
    %79 = vector.multi_reduction <add>, %78, %cst_48 [0] : vector<128x128xf32> to vector<128xf32>
    %80 = vector.shape_cast %79 : vector<128xf32> to vector<1x128xf32>
    %81 = arith.negf %80 : vector<1x128xf32>
    %82 = math.exp %81 : vector<1x128xf32>
    %cst_49 = arith.constant 1.000000e+00 : f32
    %83 = vector.broadcast %cst_49 : f32 to vector<1x128xf32>
    %84 = arith.addf %83, %82 : vector<1x128xf32>
    %85 = arith.divf %83, %84 : vector<1x128xf32>
    %c6_50 = arith.constant 6 : index
    %c0_51 = arith.constant 0 : index
    %86 = vector.load %arg4[%c6_50, %c0_51] : memref<8x128xf32, #tpu.memory_space<vmem>>, vector<1x128xf32>
    tpu.vector_store %arg4[%c6_50, %c0_51], %85 {strides = array<i32>} : memref<8x128xf32, #tpu.memory_space<vmem>>, vector<1x128xf32>,
    %c7 = arith.constant 7 : index
    %c0_52 = arith.constant 0 : index
    %c0_53 = arith.constant 0 : index
    %87 = vector.load %arg3[%c7, %c0_52, %c0_53] : memref<8x128x128xbf16, #tpu.memory_space<vmem>>, vector<1x128x128xbf16>
    %88 = vector.shape_cast %87 : vector<1x128x128xbf16> to vector<128x128xbf16>
    %cst_54 = arith.constant dense<0.000000e+00> : vector<128x128xf32>
    %89 = tpu.matmul %88, %0, %cst_54 {dimension_numbers = #tpu.dot_dimension_numbers<[1], [0], [0], [1], [0, 0, 1, 1], [], []>} : vector<128x128xbf16>, vector<128x128xbf16>, vector<128x128xf32> -> vector<128x128xf32>
    %90 = arith.mulf %89, %2 : vector<128x128xf32>
    %cst_55 = arith.constant dense<0.000000e+00> : vector<128xf32>
    %91 = vector.multi_reduction <add>, %90, %cst_55 [0] : vector<128x128xf32> to vector<128xf32>
    %92 = vector.shape_cast %91 : vector<128xf32> to vector<1x128xf32>
    %93 = arith.negf %92 : vector<1x128xf32>
    %94 = math.exp %93 : vector<1x128xf32>
    %cst_56 = arith.constant 1.000000e+00 : f32
    %95 = vector.broadcast %cst_56 : f32 to vector<1x128xf32>
    %96 = arith.addf %95, %94 : vector<1x128xf32>
    %97 = arith.divf %95, %96 : vector<1x128xf32>
    %c7_57 = arith.constant 7 : index
    %c0_58 = arith.constant 0 : index
    %98 = vector.load %arg4[%c7_57, %c0_58] : memref<8x128xf32, #tpu.memory_space<vmem>>, vector<1x128xf32>
    tpu.vector_store %arg4[%c7_57, %c0_58], %97 {strides = array<i32>} : memref<8x128xf32, #tpu.memory_space<vmem>>, vector<1x128xf32>,
    return
  }
  func.func @transform_0(%arg0: i32) -> (i32, i32) {
    %c0_i32 = arith.constant 0 : i32
    %c0_i32_0 = arith.constant 0 : i32
    return %c0_i32, %arg0 : i32, i32
  }
  func.func @transform_1(%arg0: i32) -> (i32, i32) {
    %c0_i32 = arith.constant 0 : i32
    %c0_i32_0 = arith.constant 0 : i32
    return %c0_i32, %arg0 : i32, i32
  }
  func.func @transform_2(%arg0: i32) -> (i32, i32, i32) {
    %c0_i32 = arith.constant 0 : i32
    %c0_i32_0 = arith.constant 0 : i32
    %c0_i32_1 = arith.constant 0 : i32
    %c0_i32_2 = arith.constant 0 : i32
    return %c0_i32, %c0_i32_0, %c0_i32_1 : i32, i32, i32
  }
  func.func @transform_3(%arg0: i32) -> (i32, i32) {
    %c0_i32 = arith.constant 0 : i32
    %c0_i32_0 = arith.constant 0 : i32
    return %c0_i32, %arg0 : i32, i32
  }
}

</mosaic_0001>

<llo_original>
// kernel: ddi_decagon_prob_forward.3
$region0: #{ddi_decagon_prob_forward.3}
  #allocation0 [shape = 'u32[]', space=smem, size = 0x4, offset = 0x4, fixed_abs, tag = 'smem constant byte address 0x4 - core index']
  #allocation1 [shape = 'u32[72,128]{1,0:T(1,128)}', space=vmem, size = 0x9000, scoped, tag = 'internal scratch']
  #allocation2 [shape = 'bf16[512,128]{1,0:T(8,128)(2,1)}', space=vmem, size = 0x20000, scoped, tag = 'scratch operand']
  %s0 = inlined_call_operand.vmem [shape: bf16[64,512], index: 0, kind: input, shape index: {}]
  %s1 = inlined_call_operand.vmem [shape: bf16[64,128], index: 1, kind: input, shape index: {}, may-alias: {1,2}]
  %s2 = inlined_call_operand.vmem [shape: bf16[64,128], index: 2, kind: input, shape index: {}, may-alias: {1,2}]
  %s3 = inlined_call_operand.vmem [shape: bf16[128,1024], index: 3, kind: input, shape index: {}]
  %s4 = inlined_call_operand.vmem [shape: bf16[128,128], index: 4, kind: input, shape index: {}]
  %s5 = inlined_call_operand.vmem [shape: bf16[64,128], index: 5, kind: output, shape index: {}]
  %s6 = sld [smem:[#allocation0]]
  $region30: #{ddi_decagon_prob_forward.3} parent=0
    _
  %s8 = ssub.s32 1, %s6
  %s9 = scalar_select 0, %s8, %s6
  // Predicated region
  $region2: #{ddi_decagon_prob_forward.3} parent=0 // pred_check
    _
  $region3: #{ddi_decagon_prob_forward.3} parent=0 // pred_check_branch
    %11 = sbr.rel (0) target = $region5
  $region4: #{ddi_decagon_prob_forward.3} parent=0 // pred_region
    _
  $region5: #{ddi_decagon_prob_forward.3} parent=0 // pred_fallthru
    _
  // Predicated region
  $region6: #{ddi_decagon_prob_forward.3} parent=0 // pred_check
    _
  $region7: #{ddi_decagon_prob_forward.3} parent=0 // pred_check_branch
    %13 = sbr.rel (0) target = $region9
  $region8: #{ddi_decagon_prob_forward.3} parent=0 // pred_region
    _
  $region9: #{ddi_decagon_prob_forward.3} parent=0 // pred_fallthru
    _
  // Predicated region
  $region10: #{ddi_decagon_prob_forward.3} parent=0 // pred_check
    _
  $region11: #{ddi_decagon_prob_forward.3} parent=0 // pred_check_branch
    %15 = sbr.rel (0) target = $region13
  $region12: #{ddi_decagon_prob_forward.3} parent=0 // pred_region
    _
  $region13: #{ddi_decagon_prob_forward.3} parent=0 // pred_fallthru
    _
  // Predicated region
  $region14: #{ddi_decagon_prob_forward.3} parent=0 // pred_check
    _
  $region15: #{ddi_decagon_prob_forward.3} parent=0 // pred_check_branch
    %17 = sbr.rel (0) target = $region17
  $region16: #{ddi_decagon_prob_forward.3} parent=0 // pred_region
    _
  $region17: #{ddi_decagon_prob_forward.3} parent=0 // pred_fallthru
    _
  // Predicated region
  $region18: #{ddi_decagon_prob_forward.3} parent=0 // pred_check
    _
  $region19: #{ddi_decagon_prob_forward.3} parent=0 // pred_check_branch
    %19 = sbr.rel (0) target = $region21
  $region20: #{ddi_decagon_prob_forward.3} parent=0 // pred_region
    _
  $region21: #{ddi_decagon_prob_forward.3} parent=0 // pred_fallthru
    _
  %v20 = vld [vmem:[%s1] sm:$0xf]
  %v21 = vld [vmem:[%s1 + $0x4] sm:$0xf]
  %v22 = vld [vmem:[%s1 + $0x8] sm:$0xf]
  %v23 = vld [vmem:[%s1 + $0xc] sm:$0xf]
  %v24 = vld [vmem:[%s1 + $0x10] sm:$0xf]
  %v25 = vld [vmem:[%s1 + $0x14] sm:$0xf]
  %v26 = vld [vmem:[%s1 + $0x18] sm:$0xf]
  %v27 = vld [vmem:[%s1 + $0x1c] sm:$0xf]
  %v28 = vld [vmem:[%s3] sm:$0xff]
  %v29 = vld [vmem:[%s3 + $0x8] sm:$0xff]
  %v30 = vld [vmem:[%s3 + $0x10] sm:$0xff]
  %v31 = vld [vmem:[%s3 + $0x18] sm:$0xff]
  %v32 = vld [vmem:[%s3 + $0x20] sm:$0xff]
  %v33 = vld [vmem:[%s3 + $0x28] sm:$0xff]
  %v34 = vld [vmem:[%s3 + $0x30] sm:$0xff]
  %v35 = vld [vmem:[%s3 + $0x38] sm:$0xff]
  %v36 = vld [vmem:[%s3 + $0x40] sm:$0xff]
  %v37 = vld [vmem:[%s3 + $0x48] sm:$0xff]
  %v38 = vld [vmem:[%s3 + $0x50] sm:$0xff]
  %v39 = vld [vmem:[%s3 + $0x58] sm:$0xff]
  %v40 = vld [vmem:[%s3 + $0x60] sm:$0xff]
  %v41 = vld [vmem:[%s3 + $0x68] sm:$0xff]
  %v42 = vld [vmem:[%s3 + $0x70] sm:$0xff]
  %v43 = vld [vmem:[%s3 + $0x78] sm:$0xff]
  %v44 = vld [vmem:[%s3 + $0x80] sm:$0xff]
  %v45 = vld [vmem:[%s3 + $0x88] sm:$0xff]
  %v46 = vld [vmem:[%s3 + $0x90] sm:$0xff]
  %v47 = vld [vmem:[%s3 + $0x98] sm:$0xff]
  %v48 = vld [vmem:[%s3 + $0xa0] sm:$0xff]
  %v49 = vld [vmem:[%s3 + $0xa8] sm:$0xff]
  %v50 = vld [vmem:[%s3 + $0xb0] sm:$0xff]
  %v51 = vld [vmem:[%s3 + $0xb8] sm:$0xff]
  %v52 = vld [vmem:[%s3 + $0xc0] sm:$0xff]
  %v53 = vld [vmem:[%s3 + $0xc8] sm:$0xff]
  %v54 = vld [vmem:[%s3 + $0xd0] sm:$0xff]
  %v55 = vld [vmem:[%s3 + $0xd8] sm:$0xff]
  %v56 = vld [vmem:[%s3 + $0xe0] sm:$0xff]
  %v57 = vld [vmem:[%s3 + $0xe8] sm:$0xff]
  %v58 = vld [vmem:[%s3 + $0xf0] sm:$0xff]
  %v59 = vld [vmem:[%s3 + $0xf8] sm:$0xff]
  %v60 = vld [vmem:[%s3 + $0x100] sm:$0xff]
  %v61 = vld [vmem:[%s3 + $0x108] sm:$0xff]
  %v62 = vld [vmem:[%s3 + $0x110] sm:$0xff]
  %v63 = vld [vmem:[%s3 + $0x118] sm:$0xff]
  %v64 = vld [vmem:[%s3 + $0x120] sm:$0xff]
  %v65 = vld [vmem:[%s3 + $0x128] sm:$0xff]
  %v66 = vld [vmem:[%s3 + $0x130] sm:$0xff]
  %v67 = vld [vmem:[%s3 + $0x138] sm:$0xff]
  %v68 = vld [vmem:[%s3 + $0x140] sm:$0xff]
  %v69 = vld [vmem:[%s3 + $0x148] sm:$0xff]
  %v70 = vld [vmem:[%s3 + $0x150] sm:$0xff]
  %v71 = vld [vmem:[%s3 + $0x158] sm:$0xff]
  %v72 = vld [vmem:[%s3 + $0x160] sm:$0xff]
  %v73 = vld [vmem:[%s3 + $0x168] sm:$0xff]
  %v74 = vld [vmem:[%s3 + $0x170] sm:$0xff]
  %v75 = vld [vmem:[%s3 + $0x178] sm:$0xff]
  %v76 = vld [vmem:[%s3 + $0x180] sm:$0xff]
  %v77 = vld [vmem:[%s3 + $0x188] sm:$0xff]
  %v78 = vld [vmem:[%s3 + $0x190] sm:$0xff]
  %v79 = vld [vmem:[%s3 + $0x198] sm:$0xff]
  %v80 = vld [vmem:[%s3 + $0x1a0] sm:$0xff]
  %v81 = vld [vmem:[%s3 + $0x1a8] sm:$0xff]
  %v82 = vld [vmem:[%s3 + $0x1b0] sm:$0xff]
  %v83 = vld [vmem:[%s3 + $0x1b8] sm:$0xff]
  %v84 = vld [vmem:[%s3 + $0x1c0] sm:$0xff]
  %v85 = vld [vmem:[%s3 + $0x1c8] sm:$0xff]
  %v86 = vld [vmem:[%s3 + $0x1d0] sm:$0xff]
  %v87 = vld [vmem:[%s3 + $0x1d8] sm:$0xff]
  %v88 = vld [vmem:[%s3 + $0x1e0] sm:$0xff]
  %v89 = vld [vmem:[%s3 + $0x1e8] sm:$0xff]
  %v90 = vld [vmem:[%s3 + $0x1f0] sm:$0xff]
  %v91 = vld [vmem:[%s3 + $0x1f8] sm:$0xff]
  %v100 = vunpack.c.l.b16 %v20
  %v101 = vunpack.c.l.b16 %v21
  %v102 = vunpack.c.l.b16 %v22
  %v103 = vunpack.c.l.b16 %v23
  %v104 = vunpack.c.l.b16 %v24
  %v105 = vunpack.c.l.b16 %v25
  %v106 = vunpack.c.l.b16 %v26
  %v107 = vunpack.c.l.b16 %v27
  %v108 = vpack.c.b16 %v101, %v100
  %v109 = vpack.c.b16 %v103, %v102
  %v110 = vpack.c.b16 %v105, %v104
  %v111 = vpack.c.b16 %v107, %v106
  %v180 = vunpack.c.l.b16 %v28
  %v181 = vunpack.c.h.b16 %v28
  %v182 = vunpack.c.l.b16 %v29
  %v183 = vunpack.c.h.b16 %v29
  %v184 = vunpack.c.l.b16 %v30
  %v185 = vunpack.c.h.b16 %v30
  %v186 = vunpack.c.l.b16 %v31
  %v187 = vunpack.c.h.b16 %v31
  %v188 = vunpack.c.l.b16 %v32
  %v189 = vunpack.c.h.b16 %v32
  %v190 = vunpack.c.l.b16 %v33
  %v191 = vunpack.c.h.b16 %v33
  %v192 = vunpack.c.l.b16 %v34
  %v193 = vunpack.c.h.b16 %v34
  %v194 = vunpack.c.l.b16 %v35
  %v195 = vunpack.c.h.b16 %v35
  %v196 = vunpack.c.l.b16 %v36
  %v197 = vunpack.c.h.b16 %v36
  %v198 = vunpack.c.l.b16 %v37
  %v199 = vunpack.c.h.b16 %v37
  %v200 = vunpack.c.l.b16 %v38
  %v201 = vunpack.c.h.b16 %v38
  %v202 = vunpack.c.l.b16 %v39
  %v203 = vunpack.c.h.b16 %v39
  %v204 = vunpack.c.l.b16 %v40
  %v205 = vunpack.c.h.b16 %v40
  %v206 = vunpack.c.l.b16 %v41
  %v207 = vunpack.c.h.b16 %v41
  %v208 = vunpack.c.l.b16 %v42
  %v209 = vunpack.c.h.b16 %v42
  %v210 = vunpack.c.l.b16 %v43
  %v211 = vunpack.c.h.b16 %v43
  %v212 = vunpack.c.l.b16 %v44
  %v213 = vunpack.c.h.b16 %v44
  %v214 = vunpack.c.l.b16 %v45
  %v215 = vunpack.c.h.b16 %v45
  %v216 = vunpack.c.l.b16 %v46
  %v217 = vunpack.c.h.b16 %v46
  %v218 = vunpack.c.l.b16 %v47
  %v219 = vunpack.c.h.b16 %v47
  %v220 = vunpack.c.l.b16 %v48
  %v221 = vunpack.c.h.b16 %v48
  %v222 = vunpack.c.l.b16 %v49
  %v223 = vunpack.c.h.b16 %v49
  %v224 = vunpack.c.l.b16 %v50
  %v225 = vunpack.c.h.b16 %v50
  %v226 = vunpack.c.l.b16 %v51
  %v227 = vunpack.c.h.b16 %v51
  %v228 = vunpack.c.l.b16 %v52
  %v229 = vunpack.c.h.b16 %v52
  %v230 = vunpack.c.l.b16 %v53
  %v231 = vunpack.c.h.b16 %v53
  %v232 = vunpack.c.l.b16 %v54
  %v233 = vunpack.c.h.b16 %v54
  %v234 = vunpack.c.l.b16 %v55
  %v235 = vunpack.c.h.b16 %v55
  %v236 = vunpack.c.l.b16 %v56
  %v237 = vunpack.c.h.b16 %v56
  %v238 = vunpack.c.l.b16 %v57
  %v239 = vunpack.c.h.b16 %v57
  %v240 = vunpack.c.l.b16 %v58
  %v241 = vunpack.c.h.b16 %v58
  %v242 = vunpack.c.l.b16 %v59
  %v243 = vunpack.c.h.b16 %v59
  %v244 = vunpack.c.l.b16 %v60
  %v245 = vunpack.c.h.b16 %v60
  %v246 = vunpack.c.l.b16 %v61
  %v247 = vunpack.c.h.b16 %v61
  %v248 = vunpack.c.l.b16 %v62
  %v249 = vunpack.c.h.b16 %v62
  %v250 = vunpack.c.l.b16 %v63
  %v251 = vunpack.c.h.b16 %v63
  %v252 = vunpack.c.l.b16 %v64
  %v253 = vunpack.c.h.b16 %v64
  %v254 = vunpack.c.l.b16 %v65
  %v255 = vunpack.c.h.b16 %v65
  %v256 = vunpack.c.l.b16 %v66
  %v257 = vunpack.c.h.b16 %v66
  %v258 = vunpack.c.l.b16 %v67
  %v259 = vunpack.c.h.b16 %v67
  %v260 = vunpack.c.l.b16 %v68
  %v261 = vunpack.c.h.b16 %v68
  %v262 = vunpack.c.l.b16 %v69
  %v263 = vunpack.c.h.b16 %v69
  %v264 = vunpack.c.l.b16 %v70
  %v265 = vunpack.c.h.b16 %v70
  %v266 = vunpack.c.l.b16 %v71
  %v267 = vunpack.c.h.b16 %v71
  %v268 = vunpack.c.l.b16 %v72
  %v269 = vunpack.c.h.b16 %v72
  %v270 = vunpack.c.l.b16 %v73
  %v271 = vunpack.c.h.b16 %v73
  %v272 = vunpack.c.l.b16 %v74
  %v273 = vunpack.c.h.b16 %v74
  %v274 = vunpack.c.l.b16 %v75
  %v275 = vunpack.c.h.b16 %v75
  %v276 = vunpack.c.l.b16 %v76
  %v277 = vunpack.c.h.b16 %v76
  %v278 = vunpack.c.l.b16 %v77
  %v279 = vunpack.c.h.b16 %v77
  %v280 = vunpack.c.l.b16 %v78
  %v281 = vunpack.c.h.b16 %v78
  %v282 = vunpack.c.l.b16 %v79
  %v283 = vunpack.c.h.b16 %v79
  %v284 = vunpack.c.l.b16 %v80
  %v285 = vunpack.c.h.b16 %v80
  %v286 = vunpack.c.l.b16 %v81
  %v287 = vunpack.c.h.b16 %v81
  %v288 = vunpack.c.l.b16 %v82
  %v289 = vunpack.c.h.b16 %v82
  %v290 = vunpack.c.l.b16 %v83
  %v291 = vunpack.c.h.b16 %v83
  %v292 = vunpack.c.l.b16 %v84
  %v293 = vunpack.c.h.b16 %v84
  %v294 = vunpack.c.l.b16 %v85
  %v295 = vunpack.c.h.b16 %v85
  %v296 = vunpack.c.l.b16 %v86
  %v297 = vunpack.c.h.b16 %v86
  %v298 = vunpack.c.l.b16 %v87
  %v299 = vunpack.c.h.b16 %v87
  %v300 = vunpack.c.l.b16 %v88
  %v301 = vunpack.c.h.b16 %v88
  %v302 = vunpack.c.l.b16 %v89
  %v303 = vunpack.c.h.b16 %v89
  %v304 = vunpack.c.l.b16 %v90
  %v305 = vunpack.c.h.b16 %v90
  %v306 = vunpack.c.l.b16 %v91
  %v307 = vunpack.c.h.b16 %v91
  %v308 = vpack.c.b16 %v188, %v180
  %v309 = vpack.c.b16 %v189, %v181
  %v310 = vpack.c.b16 %v190, %v182
  %v311 = vpack.c.b16 %v191, %v183
  %v312 = vpack.c.b16 %v192, %v184
  %v313 = vpack.c.b16 %v193, %v185
  %v314 = vpack.c.b16 %v194, %v186
  %v315 = vpack.c.b16 %v195, %v187
  %v316 = vpack.c.b16 %v204, %v196
  %v317 = vpack.c.b16 %v205, %v197
  %v318 = vpack.c.b16 %v206, %v198
  %v319 = vpack.c.b16 %v207, %v199
  %v320 = vpack.c.b16 %v208, %v200
  %v321 = vpack.c.b16 %v209, %v201
  %v322 = vpack.c.b16 %v210, %v202
  %v323 = vpack.c.b16 %v211, %v203
  %v324 = vpack.c.b16 %v220, %v212
  %v325 = vpack.c.b16 %v221, %v213
  %v326 = vpack.c.b16 %v222, %v214
  %v327 = vpack.c.b16 %v223, %v215
  %v328 = vpack.c.b16 %v224, %v216
  %v329 = vpack.c.b16 %v225, %v217
  %v330 = vpack.c.b16 %v226, %v218
  %v331 = vpack.c.b16 %v227, %v219
  %v332 = vpack.c.b16 %v236, %v228
  %v333 = vpack.c.b16 %v237, %v229
  %v334 = vpack.c.b16 %v238, %v230
  %v335 = vpack.c.b16 %v239, %v231
  %v336 = vpack.c.b16 %v240, %v232
  %v337 = vpack.c.b16 %v241, %v233
  %v338 = vpack.c.b16 %v242, %v234
  %v339 = vpack.c.b16 %v243, %v235
  %v340 = vpack.c.b16 %v252, %v244
  %v341 = vpack.c.b16 %v253, %v245
  %v342 = vpack.c.b16 %v254, %v246
  %v343 = vpack.c.b16 %v255, %v247
  %v344 = vpack.c.b16 %v256, %v248
  %v345 = vpack.c.b16 %v257, %v249
  %v346 = vpack.c.b16 %v258, %v250
  %v347 = vpack.c.b16 %v259, %v251
  %v348 = vpack.c.b16 %v268, %v260
  %v349 = vpack.c.b16 %v269, %v261
  %v350 = vpack.c.b16 %v270, %v262
  %v351 = vpack.c.b16 %v271, %v263
  %v352 = vpack.c.b16 %v272, %v264
  %v353 = vpack.c.b16 %v273, %v265
  %v354 = vpack.c.b16 %v274, %v266
  %v355 = vpack.c.b16 %v275, %v267
  %v356 = vpack.c.b16 %v284, %v276
  %v357 = vpack.c.b16 %v285, %v277
  %v358 = vpack.c.b16 %v286, %v278
  %v359 = vpack.c.b16 %v287, %v279
  %v360 = vpack.c.b16 %v288, %v280
  %v361 = vpack.c.b16 %v289, %v281
  %v362 = vpack.c.b16 %v290, %v282
  %v363 = vpack.c.b16 %v291, %v283
  %v364 = vpack.c.b16 %v300, %v292
  %v365 = vpack.c.b16 %v301, %v293
  %v366 = vpack.c.b16 %v302, %v294
  %v367 = vpack.c.b16 %v303, %v295
  %v368 = vpack.c.b16 %v304, %v296
  %v369 = vpack.c.b16 %v305, %v297
  %v370 = vpack.c.b16 %v306, %v298
  %v371 = vpack.c.b16 %v307, %v299
  %436 = vmatpush.bf16.msra.mxu0 %v364
  %437 = vmatpush.bf16.msra.mxu0 %v356
  %438 = vmatpush.bf16.msra.mxu0 %v348
  %439 = vmatpush.bf16.msra.mxu0 %v340
  %440 = vmatpush.bf16.msra.mxu0 %v332
  %441 = vmatpush.bf16.msra.mxu0 %v324
  %442 = vmatpush.bf16.msra.mxu0 %v316
  %443 = vmatpush.bf16.msra.mxu0 %v308
  %444 = vmatmul.bf16.gmra.mxu0 %v108
  %v445 = vpop.f32.mrf.mxu0
  %v446 = vadd.f32 0.0, %v445
  %v447 = vpop.f32.mrf.mxu0
  %v448 = vadd.f32 0.0, %v447
  %449 = vmatmul.bf16.gmra.mxu0 %v109
  %v450 = vpop.f32.mrf.mxu0
  %v451 = vadd.f32 0.0, %v450
  %v452 = vpop.f32.mrf.mxu0
  %v453 = vadd.f32 0.0, %v452
  %454 = vmatmul.bf16.gmra.mxu0 %v110
  %v455 = vpop.f32.mrf.mxu0
  %v456 = vadd.f32 0.0, %v455
  %v457 = vpop.f32.mrf.mxu0
  %v458 = vadd.f32 0.0, %v457
  %459 = vmatmul.bf16.gmra.mxu0 %v111
  %v460 = vpop.f32.mrf.mxu0
  %v461 = vadd.f32 0.0, %v460
  %v462 = vpop.f32.mrf.mxu0
  %v463 = vadd.f32 0.0, %v462
  %464 = vdwg.mxu0
  %465 = vmatpush.bf16.msra.mxu0 %v365
  %466 = vmatpush.bf16.msra.mxu0 %v357
  %467 = vmatpush.bf16.msra.mxu0 %v349
  %468 = vmatpush.bf16.msra.mxu0 %v341
  %469 = vmatpush.bf16.msra.mxu0 %v333
  %470 = vmatpush.bf16.msra.mxu0 %v325
  %471 = vmatpush.bf16.msra.mxu0 %v317
  %472 = vmatpush.bf16.msra.mxu0 %v309
  %473 = vmatmul.bf16.gmra.mxu0 %v108
  %v474 = vpop.f32.mrf.mxu0
  %v475 = vadd.f32 0.0, %v474
  %v476 = vpop.f32.mrf.mxu0
  %v477 = vadd.f32 0.0, %v476
  %478 = vmatmul.bf16.gmra.mxu0 %v109
  %v479 = vpop.f32.mrf.mxu0
  %v480 = vadd.f32 0.0, %v479
  %v481 = vpop.f32.mrf.mxu0
  %v482 = vadd.f32 0.0, %v481
  %483 = vmatmul.bf16.gmra.mxu0 %v110
  %v484 = vpop.f32.mrf.mxu0
  %v485 = vadd.f32 0.0, %v484
  %v486 = vpop.f32.mrf.mxu0
  %v487 = vadd.f32 0.0, %v486
  %488 = vmatmul.bf16.gmra.mxu0 %v111
  %v489 = vpop.f32.mrf.mxu0
  %v490 = vadd.f32 0.0, %v489
  %v491 = vpop.f32.mrf.mxu0
  %v492 = vadd.f32 0.0, %v491
  %493 = vdwg.mxu0
  %494 = vmatpush.bf16.msra.mxu0 %v366
  %495 = vmatpush.bf16.msra.mxu0 %v358
  %496 = vmatpush.bf16.msra.mxu0 %v350
  %497 = vmatpush.bf16.msra.mxu0 %v342
  %498 = vmatpush.bf16.msra.mxu0 %v334
  %499 = vmatpush.bf16.msra.mxu0 %v326
  %500 = vmatpush.bf16.msra.mxu0 %v318
  %501 = vmatpush.bf16.msra.mxu0 %v310
  %502 = vmatmul.bf16.gmra.mxu0 %v108
  %v503 = vpop.f32.mrf.mxu0
  %v504 = vadd.f32 0.0, %v503
  %v505 = vpop.f32.mrf.mxu0
  %v506 = vadd.f32 0.0, %v505
  %507 = vmatmul.bf16.gmra.mxu0 %v109
  %v508 = vpop.f32.mrf.mxu0
  %v509 = vadd.f32 0.0, %v508
  %v510 = vpop.f32.mrf.mxu0
  %v511 = vadd.f32 0.0, %v510
  %512 = vmatmul.bf16.gmra.mxu0 %v110
  %v513 = vpop.f32.mrf.mxu0
  %v514 = vadd.f32 0.0, %v513
  %v515 = vpop.f32.mrf.mxu0
  %v516 = vadd.f32 0.0, %v515
  %517 = vmatmul.bf16.gmra.mxu0 %v111
  %v518 = vpop.f32.mrf.mxu0
  %v519 = vadd.f32 0.0, %v518
  %v520 = vpop.f32.mrf.mxu0
  %v521 = vadd.f32 0.0, %v520
  %522 = vdwg.mxu0
  %523 = vmatpush.bf16.msra.mxu0 %v367
  %524 = vmatpush.bf16.msra.mxu0 %v359
  %525 = vmatpush.bf16.msra.mxu0 %v351
  %526 = vmatpush.bf16.msra.mxu0 %v343
  %527 = vmatpush.bf16.msra.mxu0 %v335
  %528 = vmatpush.bf16.msra.mxu0 %v327
  %529 = vmatpush.bf16.msra.mxu0 %v319
  %530 = vmatpush.bf16.msra.mxu0 %v311
  %531 = vmatmul.bf16.gmra.mxu0 %v108
  %v532 = vpop.f32.mrf.mxu0
  %v533 = vadd.f32 0.0, %v532
  %v534 = vpop.f32.mrf.mxu0
  %v535 = vadd.f32 0.0, %v534
  %536 = vmatmul.bf16.gmra.mxu0 %v109
  %v537 = vpop.f32.mrf.mxu0
  %v538 = vadd.f32 0.0, %v537
  %v539 = vpop.f32.mrf.mxu0
  %v540 = vadd.f32 0.0, %v539
  %541 = vmatmul.bf16.gmra.mxu0 %v110
  %v542 = vpop.f32.mrf.mxu0
  %v543 = vadd.f32 0.0, %v542
  %v544 = vpop.f32.mrf.mxu0
  %v545 = vadd.f32 0.0, %v544
  %546 = vmatmul.bf16.gmra.mxu0 %v111
  %v547 = vpop.f32.mrf.mxu0
  %v548 = vadd.f32 0.0, %v547
  %v549 = vpop.f32.mrf.mxu0
  %v550 = vadd.f32 0.0, %v549
  %551 = vdwg.mxu0
  %552 = vmatpush.bf16.msra.mxu0 %v368
  %553 = vmatpush.bf16.msra.mxu0 %v360
  %554 = vmatpush.bf16.msra.mxu0 %v352
  %555 = vmatpush.bf16.msra.mxu0 %v344
  %556 = vmatpush.bf16.msra.mxu0 %v336
  %557 = vmatpush.bf16.msra.mxu0 %v328
  %558 = vmatpush.bf16.msra.mxu0 %v320
  %559 = vmatpush.bf16.msra.mxu0 %v312
  %560 = vmatmul.bf16.gmra.mxu0 %v108
  %v561 = vpop.f32.mrf.mxu0
  %v562 = vadd.f32 0.0, %v561
  %v563 = vpop.f32.mrf.mxu0
  %v564 = vadd.f32 0.0, %v563
  %565 = vmatmul.bf16.gmra.mxu0 %v109
  %v566 = vpop.f32.mrf.mxu0
  %v567 = vadd.f32 0.0, %v566
  %v568 = vpop.f32.mrf.mxu0
  %v569 = vadd.f32 0.0, %v568
  %570 = vmatmul.bf16.gmra.mxu0 %v110
  %v571 = vpop.f32.mrf.mxu0
  %v572 = vadd.f32 0.0, %v571
  %v573 = vpop.f32.mrf.mxu0
  %v574 = vadd.f32 0.0, %v573
  %575 = vmatmul.bf16.gmra.mxu0 %v111
  %v576 = vpop.f32.mrf.mxu0
  %v577 = vadd.f32 0.0, %v576
  %v578 = vpop.f32.mrf.mxu0
  %v579 = vadd.f32 0.0, %v578
  %580 = vdwg.mxu0
  %581 = vmatpush.bf16.msra.mxu0 %v369
  %582 = vmatpush.bf16.msra.mxu0 %v361
  %583 = vmatpush.bf16.msra.mxu0 %v353
  %584 = vmatpush.bf16.msra.mxu0 %v345
  %585 = vmatpush.bf16.msra.mxu0 %v337
  %586 = vmatpush.bf16.msra.mxu0 %v329
  %587 = vmatpush.bf16.msra.mxu0 %v321
  %588 = vmatpush.bf16.msra.mxu0 %v313
  %589 = vmatmul.bf16.gmra.mxu0 %v108
  %v590 = vpop.f32.mrf.mxu0
  %v591 = vadd.f32 0.0, %v590
  %v592 = vpop.f32.mrf.mxu0
  %v593 = vadd.f32 0.0, %v592
  %594 = vmatmul.bf16.gmra.mxu0 %v109
  %v595 = vpop.f32.mrf.mxu0
  %v596 = vadd.f32 0.0, %v595
  %v597 = vpop.f32.mrf.mxu0
  %v598 = vadd.f32 0.0, %v597
  %599 = vmatmul.bf16.gmra.mxu0 %v110
  %v600 = vpop.f32.mrf.mxu0
  %v601 = vadd.f32 0.0, %v600
  %v602 = vpop.f32.mrf.mxu0
  %v603 = vadd.f32 0.0, %v602
  %604 = vmatmul.bf16.gmra.mxu0 %v111
  %v605 = vpop.f32.mrf.mxu0
  %v606 = vadd.f32 0.0, %v605
  %v607 = vpop.f32.mrf.mxu0
  %v608 = vadd.f32 0.0, %v607
  %609 = vdwg.mxu0
  %610 = vmatpush.bf16.msra.mxu0 %v370
  %611 = vmatpush.bf16.msra.mxu0 %v362
  %612 = vmatpush.bf16.msra.mxu0 %v354
  %613 = vmatpush.bf16.msra.mxu0 %v346
  %614 = vmatpush.bf16.msra.mxu0 %v338
  %615 = vmatpush.bf16.msra.mxu0 %v330
  %616 = vmatpush.bf16.msra.mxu0 %v322
  %617 = vmatpush.bf16.msra.mxu0 %v314
  %618 = vmatmul.bf16.gmra.mxu0 %v108
  %v619 = vpop.f32.mrf.mxu0
  %v620 = vadd.f32 0.0, %v619
  %v621 = vpop.f32.mrf.mxu0
  %v622 = vadd.f32 0.0, %v621
  %623 = vmatmul.bf16.gmra.mxu0 %v109
  %v624 = vpop.f32.mrf.mxu0
  %v625 = vadd.f32 0.0, %v624
  %v626 = vpop.f32.mrf.mxu0
  %v627 = vadd.f32 0.0, %v626
  %628 = vmatmul.bf16.gmra.mxu0 %v110
  %v629 = vpop.f32.mrf.mxu0
  %v630 = vadd.f32 0.0, %v629
  %v631 = vpop.f32.mrf.mxu0
  %v632 = vadd.f32 0.0, %v631
  %633 = vmatmul.bf16.gmra.mxu0 %v111
  %v634 = vpop.f32.mrf.mxu0
  %v635 = vadd.f32 0.0, %v634
  %v636 = vpop.f32.mrf.mxu0
  %v637 = vadd.f32 0.0, %v636
  %638 = vdwg.mxu0
  %639 = vmatpush.bf16.msra.mxu0 %v371
  %640 = vmatpush.bf16.msra.mxu0 %v363
  %641 = vmatpush.bf16.msra.mxu0 %v355
  %642 = vmatpush.bf16.msra.mxu0 %v347
  %643 = vmatpush.bf16.msra.mxu0 %v339
  %644 = vmatpush.bf16.msra.mxu0 %v331
  %645 = vmatpush.bf16.msra.mxu0 %v323
  %646 = vmatpush.bf16.msra.mxu0 %v315
  %647 = vmatmul.bf16.gmra.mxu0 %v108
  %v648 = vpop.f32.mrf.mxu0
  %v649 = vadd.f32 0.0, %v648
  %v650 = vpop.f32.mrf.mxu0
  %v651 = vadd.f32 0.0, %v650
  %652 = vmatmul.bf16.gmra.mxu0 %v109
  %v653 = vpop.f32.mrf.mxu0
  %v654 = vadd.f32 0.0, %v653
  %v655 = vpop.f32.mrf.mxu0
  %v656 = vadd.f32 0.0, %v655
  %657 = vmatmul.bf16.gmra.mxu0 %v110
  %v658 = vpop.f32.mrf.mxu0
  %v659 = vadd.f32 0.0, %v658
  %v660 = vpop.f32.mrf.mxu0
  %v661 = vadd.f32 0.0, %v660
  %662 = vmatmul.bf16.gmra.mxu0 %v111
  %v663 = vpop.f32.mrf.mxu0
  %v664 = vadd.f32 0.0, %v663
  %v665 = vpop.f32.mrf.mxu0
  %v666 = vadd.f32 0.0, %v665
  %667 = vdwg.mxu0
  %v668 = vpack.c.bf16 %v475, %v446
  %v669 = vpack.c.bf16 %v533, %v504
  %v670 = vpack.c.bf16 %v591, %v562
  %v671 = vpack.c.bf16 %v649, %v620
  %v672 = vpack.c.bf16 %v477, %v448
  %v673 = vpack.c.bf16 %v535, %v506
  %v674 = vpack.c.bf16 %v593, %v564
  %v675 = vpack.c.bf16 %v651, %v622
  %v676 = vpack.c.bf16 %v480, %v451
  %v677 = vpack.c.bf16 %v538, %v509
  %v678 = vpack.c.bf16 %v596, %v567
  %v679 = vpack.c.bf16 %v654, %v625
  %v680 = vpack.c.bf16 %v482, %v453
  %v681 = vpack.c.bf16 %v540, %v511
  %v682 = vpack.c.bf16 %v598, %v569
  %v683 = vpack.c.bf16 %v656, %v627
  %v684 = vpack.c.bf16 %v485, %v456
  %v685 = vpack.c.bf16 %v543, %v514
  %v686 = vpack.c.bf16 %v601, %v572
  %v687 = vpack.c.bf16 %v659, %v630
  %v688 = vpack.c.bf16 %v487, %v458
  %v689 = vpack.c.bf16 %v545, %v516
  %v690 = vpack.c.bf16 %v603, %v574
  %v691 = vpack.c.bf16 %v661, %v632
  %v692 = vpack.c.bf16 %v490, %v461
  %v693 = vpack.c.bf16 %v548, %v519
  %v694 = vpack.c.bf16 %v606, %v577
  %v695 = vpack.c.bf16 %v664, %v635
  %v696 = vpack.c.bf16 %v492, %v463
  %v697 = vpack.c.bf16 %v550, %v521
  %v698 = vpack.c.bf16 %v608, %v579
  %v699 = vpack.c.bf16 %v666, %v637
  %700 = vst [vmem:[#allocation2] sm:$0xf] %v668
  %701 = vst [vmem:[#allocation2 + $0x4] sm:$0xf] %v672
  %702 = vst [vmem:[#allocation2 + $0x8] sm:$0xf] %v676
  %703 = vst [vmem:[#allocation2 + $0xc] sm:$0xf] %v680
  %704 = vst [vmem:[#allocation2 + $0x10] sm:$0xf] %v684
  %705 = vst [vmem:[#allocation2 + $0x14] sm:$0xf] %v688
  %706 = vst [vmem:[#allocation2 + $0x18] sm:$0xf] %v692
  %707 = vst [vmem:[#allocation2 + $0x1c] sm:$0xf] %v696
  %v716 = vrot.slane %v668, 4
  %v717 = vrot.slane %v672, 4
  %v718 = vrot.slane %v676, 4
  %v719 = vrot.slane %v680, 4
  %v720 = vrot.slane %v684, 4
  %v721 = vrot.slane %v688, 4
  %v722 = vrot.slane %v692, 4
  %v723 = vrot.slane %v696, 4
  %732 = vst [vmem:[#allocation2 + $0x20] sm:$0xf] %v716
  %733 = vst [vmem:[#allocation2 + $0x24] sm:$0xf] %v717
  %734 = vst [vmem:[#allocation2 + $0x28] sm:$0xf] %v718
  %735 = vst [vmem:[#allocation2 + $0x2c] sm:$0xf] %v719
  %736 = vst [vmem:[#allocation2 + $0x30] sm:$0xf] %v720
  %737 = vst [vmem:[#allocation2 + $0x34] sm:$0xf] %v721
  %738 = vst [vmem:[#allocation2 + $0x38] sm:$0xf] %v722
  %739 = vst [vmem:[#allocation2 + $0x3c] sm:$0xf] %v723
  %740 = vst [vmem:[#allocation2 + $0x40] sm:$0xf] %v669
  %741 = vst [vmem:[#allocation2 + $0x44] sm:$0xf] %v673
  %742 = vst [vmem:[#allocation2 + $0x48] sm:$0xf] %v677
  %743 = vst [vmem:[#allocation2 + $0x4c] sm:$0xf] %v681
  %744 = vst [vmem:[#allocation2 + $0x50] sm:$0xf] %v685
  %745 = vst [vmem:[#allocation2 + $0x54] sm:$0xf] %v689
  %746 = vst [vmem:[#allocation2 + $0x58] sm:$0xf] %v693
  %747 = vst [vmem:[#allocation2 + $0x5c] sm:$0xf] %v697
  %v756 = vrot.slane %v669, 4
  %v757 = vrot.slane %v673, 4
  %v758 = vrot.slane %v677, 4
  %v759 = vrot.slane %v681, 4
  %v760 = vrot.slane %v685, 4
  %v761 = vrot.slane %v689, 4
  %v762 = vrot.slane %v693, 4
  %v763 = vrot.slane %v697, 4
  %772 = vst [vmem:[#allocation2 + $0x60] sm:$0xf] %v756
  %773 = vst [vmem:[#allocation2 + $0x64] sm:$0xf] %v757
  %774 = vst [vmem:[#allocation2 + $0x68] sm:$0xf] %v758
  %775 = vst [vmem:[#allocation2 + $0x6c] sm:$0xf] %v759
  %776 = vst [vmem:[#allocation2 + $0x70] sm:$0xf] %v760
  %777 = vst [vmem:[#allocation2 + $0x74] sm:$0xf] %v761
  %778 = vst [vmem:[#allocation2 + $0x78] sm:$0xf] %v762
  %779 = vst [vmem:[#allocation2 + $0x7c] sm:$0xf] %v763
  %780 = vst [vmem:[#allocation2 + $0x80] sm:$0xf] %v670
  %781 = vst [vmem:[#allocation2 + $0x84] sm:$0xf] %v674
  %782 = vst [vmem:[#allocation2 + $0x88] sm:$0xf] %v678
  %783 = vst [vmem:[#allocation2 + $0x8c] sm:$0xf] %v682
  %784 = vst [vmem:[#allocation2 + $0x90] sm:$0xf] %v686
  %785 = vst [vmem:[#allocation2 + $0x94] sm:$0xf] %v690
  %786 = vst [vmem:[#allocation2 + $0x98] sm:$0xf] %v694
  %787 = vst [vmem:[#allocation2 + $0x9c] sm:$0xf] %v698
  %v796 = vrot.slane %v670, 4
  %v797 = vrot.slane %v674, 4
  %v798 = vrot.slane %v678, 4
  %v799 = vrot.slane %v682, 4
  %v800 = vrot.slane %v686, 4
  %v801 = vrot.slane %v690, 4
  %v802 = vrot.slane %v694, 4
  %v803 = vrot.slane %v698, 4
  %812 = vst [vmem:[#allocation2 + $0xa0] sm:$0xf] %v796
  %813 = vst [vmem:[#allocation2 + $0xa4] sm:$0xf] %v797
  %814 = vst [vmem:[#allocation2 + $0xa8] sm:$0xf] %v798
  %815 = vst [vmem:[#allocation2 + $0xac] sm:$0xf] %v799
  %816 = vst [vmem:[#allocation2 + $0xb0] sm:$0xf] %v800
  %817 = vst [vmem:[#allocation2 + $0xb4] sm:$0xf] %v801
  %818 = vst [vmem:[#allocation2 + $0xb8] sm:$0xf] %v802
  %819 = vst [vmem:[#allocation2 + $0xbc] sm:$0xf] %v803
  %820 = vst [vmem:[#allocation2 + $0xc0] sm:$0xf] %v671
  %821 = vst [vmem:[#allocation2 + $0xc4] sm:$0xf] %v675
  %822 = vst [vmem:[#allocation2 + $0xc8] sm:$0xf] %v679
  %823 = vst [vmem:[#allocation2 + $0xcc] sm:$0xf] %v683
  %824 = vst [vmem:[#allocation2 + $0xd0] sm:$0xf] %v687
  %825 = vst [vmem:[#allocation2 + $0xd4] sm:$0xf] %v691
  %826 = vst [vmem:[#allocation2 + $0xd8] sm:$0xf] %v695
  %827 = vst [vmem:[#allocation2 + $0xdc] sm:$0xf] %v699
  %v836 = vrot.slane %v671, 4
  %v837 = vrot.slane %v675, 4
  %v838 = vrot.slane %v679, 4
  %v839 = vrot.slane %v683, 4
  %v840 = vrot.slane %v687, 4
  %v841 = vrot.slane %v691, 4
  %v842 = vrot.slane %v695, 4
  %v843 = vrot.slane %v699, 4
  %852 = vst [vmem:[#allocation2 + $0xe0] sm:$0xf] %v836
  %853 = vst [vmem:[#allocation2 + $0xe4] sm:$0xf] %v837
  %854 = vst [vmem:[#allocation2 + $0xe8] sm:$0xf] %v838
  %855 = vst [vmem:[#allocation2 + $0xec] sm:$0xf] %v839
  %856 = vst [vmem:[#allocation2 + $0xf0] sm:$0xf] %v840
  %857 = vst [vmem:[#allocation2 + $0xf4] sm:$0xf] %v841
  %858 = vst [vmem:[#allocation2 + $0xf8] sm:$0xf] %v842
  %859 = vst [vmem:[#allocation2 + $0xfc] sm:$0xf] %v843
  %v860 = vld [vmem:[%s0] sm:$0xff]
  %v861 = vld [vmem:[%s0 + $0x8] sm:$0xff]
  %v862 = vld [vmem:[%s0 + $0x10] sm:$0xff]
  %v863 = vld [vmem:[%s0 + $0x18] sm:$0xff]
  %v864 = vld [vmem:[%s0 + $0x20] sm:$0xff]
  %v865 = vld [vmem:[%s0 + $0x28] sm:$0xff]
  %v866 = vld [vmem:[%s0 + $0x30] sm:$0xff]
  %v867 = vld [vmem:[%s0 + $0x38] sm:$0xff]
  %v868 = vld [vmem:[%s0 + $0x40] sm:$0xff]
  %v869 = vld [vmem:[%s0 + $0x48] sm:$0xff]
  %v870 = vld [vmem:[%s0 + $0x50] sm:$0xff]
  %v871 = vld [vmem:[%s0 + $0x58] sm:$0xff]
  %v872 = vld [vmem:[%s0 + $0x60] sm:$0xff]
  %v873 = vld [vmem:[%s0 + $0x68] sm:$0xff]
  %v874 = vld [vmem:[%s0 + $0x70] sm:$0xff]
  %v875 = vld [vmem:[%s0 + $0x78] sm:$0xff]
  %v876 = vld [vmem:[#allocation2] sm:$0xf]
  %v877 = vld [vmem:[#allocation2 + $0x4] sm:$0xf]
  %v878 = vld [vmem:[#allocation2 + $0x8] sm:$0xf]
  %v879 = vld [vmem:[#allocation2 + $0xc] sm:$0xf]
  %v880 = vld [vmem:[#allocation2 + $0x10] sm:$0xf]
  %v881 = vld [vmem:[#allocation2 + $0x14] sm:$0xf]
  %v882 = vld [vmem:[#allocation2 + $0x18] sm:$0xf]
  %v883 = vld [vmem:[#allocation2 + $0x1c] sm:$0xf]
  %v884 = vld [vmem:[#allocation2 + $0x20] sm:$0xf]
  %v885 = vld [vmem:[#allocation2 + $0x24] sm:$0xf]
  %v886 = vld [vmem:[#allocation2 + $0x28] sm:$0xf]
  %v887 = vld [vmem:[#allocation2 + $0x2c] sm:$0xf]
  %v888 = vld [vmem:[#allocation2 + $0x30] sm:$0xf]
  %v889 = vld [vmem:[#allocation2 + $0x34] sm:$0xf]
  %v890 = vld [vmem:[#allocation2 + $0x38] sm:$0xf]
  %v891 = vld [vmem:[#allocation2 + $0x3c] sm:$0xf]
  %v892 = vld [vmem:[#allocation2 + $0x40] sm:$0xf]
  %v893 = vld [vmem:[#allocation2 + $0x44] sm:$0xf]
  %v894 = vld [vmem:[#allocation2 + $0x48] sm:$0xf]
  %v895 = vld [vmem:[#allocation2 + $0x4c] sm:$0xf]
  %v896 = vld [vmem:[#allocation2 + $0x50] sm:$0xf]
  %v897 = vld [vmem:[#allocation2 + $0x54] sm:$0xf]
  %v898 = vld [vmem:[#allocation2 + $0x58] sm:$0xf]
  %v899 = vld [vmem:[#allocation2 + $0x5c] sm:$0xf]
  %v900 = vld [vmem:[#allocation2 + $0x60] sm:$0xf]
  %v901 = vld [vmem:[#allocation2 + $0x64] sm:$0xf]
  %v902 = vld [vmem:[#allocation2 + $0x68] sm:$0xf]
  %v903 = vld [vmem:[#allocation2 + $0x6c] sm:$0xf]
  %v904 = vld [vmem:[#allocation2 + $0x70] sm:$0xf]
  %v905 = vld [vmem:[#allocation2 + $0x74] sm:$0xf]
  %v906 = vld [vmem:[#allocation2 + $0x78] sm:$0xf]
  %v907 = vld [vmem:[#allocation2 + $0x7c] sm:$0xf]
  %v908 = vld [vmem:[#allocation2 + $0x80] sm:$0xf]
  %v909 = vld [vmem:[#allocation2 + $0x84] sm:$0xf]
  %v910 = vld [vmem:[#allocation2 + $0x88] sm:$0xf]
  %v911 = vld [vmem:[#allocation2 + $0x8c] sm:$0xf]
  %v912 = vld [vmem:[#allocation2 + $0x90] sm:$0xf]
  %v913 = vld [vmem:[#allocation2 + $0x94] sm:$0xf]
  %v914 = vld [vmem:[#allocation2 + $0x98] sm:$0xf]
  %v915 = vld [vmem:[#allocation2 + $0x9c] sm:$0xf]
  %v916 = vld [vmem:[#allocation2 + $0xa0] sm:$0xf]
  %v917 = vld [vmem:[#allocation2 + $0xa4] sm:$0xf]
  %v918 = vld [vmem:[#allocation2 + $0xa8] sm:$0xf]
  %v919 = vld [vmem:[#allocation2 + $0xac] sm:$0xf]
  %v920 = vld [vmem:[#allocation2 + $0xb0] sm:$0xf]
  %v921 = vld [vmem:[#allocation2 + $0xb4] sm:$0xf]
  %v922 = vld [vmem:[#allocation2 + $0xb8] sm:$0xf]
  %v923 = vld [vmem:[#allocation2 + $0xbc] sm:$0xf]
  %v924 = vld [vmem:[#allocation2 + $0xc0] sm:$0xf]
  %v925 = vld [vmem:[#allocation2 + $0xc4] sm:$0xf]
  %v926 = vld [vmem:[#allocation2 + $0xc8] sm:$0xf]
  %v927 = vld [vmem:[#allocation2 + $0xcc] sm:$0xf]
  %v928 = vld [vmem:[#allocation2 + $0xd0] sm:$0xf]
  %v929 = vld [vmem:[#allocation2 + $0xd4] sm:$0xf]
  %v930 = vld [vmem:[#allocation2 + $0xd8] sm:$0xf]
  %v931 = vld [vmem:[#allocation2 + $0xdc] sm:$0xf]
  %v932 = vld [vmem:[#allocation2 + $0xe0] sm:$0xf]
  %v933 = vld [vmem:[#allocation2 + $0xe4] sm:$0xf]
  %v934 = vld [vmem:[#allocation2 + $0xe8] sm:$0xf]
  %v935 = vld [vmem:[#allocation2 + $0xec] sm:$0xf]
  %v936 = vld [vmem:[#allocation2 + $0xf0] sm:$0xf]
  %v937 = vld [vmem:[#allocation2 + $0xf4] sm:$0xf]
  %v938 = vld [vmem:[#allocation2 + $0xf8] sm:$0xf]
  %v939 = vld [vmem:[#allocation2 + $0xfc] sm:$0xf]
  %v940 = vld [vmem:[%s2] sm:$0xf]
  %v941 = vld [vmem:[%s2 + $0x4] sm:$0xf]
  %v942 = vld [vmem:[%s2 + $0x8] sm:$0xf]
  %v943 = vld [vmem:[%s2 + $0xc] sm:$0xf]
  %v944 = vld [vmem:[%s2 + $0x10] sm:$0xf]
  %v945 = vld [vmem:[%s2 + $0x14] sm:$0xf]
  %v946 = vld [vmem:[%s2 + $0x18] sm:$0xf]
  %v947 = vld [vmem:[%s2 + $0x1c] sm:$0xf]
  %v948 = vld [vmem:[%s4] sm:$0xf]
  %v949 = vld [vmem:[%s4 + $0x4] sm:$0xf]
  %v950 = vld [vmem:[%s4 + $0x8] sm:$0xf]
  %v951 = vld [vmem:[%s4 + $0xc] sm:$0xf]
  %v952 = vld [vmem:[%s4 + $0x10] sm:$0xf]
  %v953 = vld [vmem:[%s4 + $0x14] sm:$0xf]
  %v954 = vld [vmem:[%s4 + $0x18] sm:$0xf]
  %v955 = vld [vmem:[%s4 + $0x1c] sm:$0xf]
  %v956 = vld [vmem:[%s4 + $0x20] sm:$0xf]
  %v957 = vld [vmem:[%s4 + $0x24] sm:$0xf]
  %v958 = vld [vmem:[%s4 + $0x28] sm:$0xf]
  %v959 = vld [vmem:[%s4 + $0x2c] sm:$0xf]
  %v960 = vld [vmem:[%s4 + $0x30] sm:$0xf]
  %v961 = vld [vmem:[%s4 + $0x34] sm:$0xf]
  %v962 = vld [vmem:[%s4 + $0x38] sm:$0xf]
  %v963 = vld [vmem:[%s4 + $0x3c] sm:$0xf]
  %v972 = vunpack.c.l.b16 %v940
  %v973 = vunpack.c.l.b16 %v941
  %v974 = vunpack.c.l.b16 %v942
  %v975 = vunpack.c.l.b16 %v943
  %v976 = vunpack.c.l.b16 %v944
  %v977 = vunpack.c.l.b16 %v945
  %v978 = vunpack.c.l.b16 %v946
  %v979 = vunpack.c.l.b16 %v947
  %v980 = vpack.c.b16 %v973, %v972
  %v981 = vpack.c.b16 %v975, %v974
  %v982 = vpack.c.b16 %v977, %v976
  %v983 = vpack.c.b16 %v979, %v978
  %v1004 = vunpack.c.l.b16 %v948
  %v1005 = vunpack.c.l.b16 %v949
  %v1006 = vunpack.c.l.b16 %v950
  %v1007 = vunpack.c.l.b16 %v951
  %v1008 = vunpack.c.l.b16 %v952
  %v1009 = vunpack.c.l.b16 %v953
  %v1010 = vunpack.c.l.b16 %v954
  %v1011 = vunpack.c.l.b16 %v955
  %v1012 = vunpack.c.l.b16 %v956
  %v1013 = vunpack.c.l.b16 %v957
  %v1014 = vunpack.c.l.b16 %v958
  %v1015 = vunpack.c.l.b16 %v959
  %v1016 = vunpack.c.l.b16 %v960
  %v1017 = vunpack.c.l.b16 %v961
  %v1018 = vunpack.c.l.b16 %v962
  %v1019 = vunpack.c.l.b16 %v963
  %v1020 = vpack.c.b16 %v1005, %v1004
  %v1021 = vpack.c.b16 %v1007, %v1006
  %v1022 = vpack.c.b16 %v1009, %v1008
  %v1023 = vpack.c.b16 %v1011, %v1010
  %v1024 = vpack.c.b16 %v1013, %v1012
  %v1025 = vpack.c.b16 %v1015, %v1014
  %v1026 = vpack.c.b16 %v1017, %v1016
  %v1027 = vpack.c.b16 %v1019, %v1018
  %1036 = vmatpush.bf16.msra.mxu0 %v1027
  %1037 = vmatpush.bf16.msra.mxu0 %v1026
  %1038 = vmatpush.bf16.msra.mxu0 %v1025
  %1039 = vmatpush.bf16.msra.mxu0 %v1024
  %1040 = vmatpush.bf16.msra.mxu0 %v1023
  %1041 = vmatpush.bf16.msra.mxu0 %v1022
  %1042 = vmatpush.bf16.msra.mxu0 %v1021
  %1043 = vmatpush.bf16.msra.mxu0 %v1020
  %1044 = vmatmul.bf16.gmra.mxu0 %v980
  %v1045 = vpop.f32.mrf.mxu0
  %v1046 = vadd.f32 0.0, %v1045
  %v1047 = vpop.f32.mrf.mxu0
  %v1048 = vadd.f32 0.0, %v1047
  %1049 = vmatmul.bf16.gmra.mxu0 %v981
  %v1050 = vpop.f32.mrf.mxu0
  %v1051 = vadd.f32 0.0, %v1050
  %v1052 = vpop.f32.mrf.mxu0
  %v1053 = vadd.f32 0.0, %v1052
  %1054 = vmatmul.bf16.gmra.mxu0 %v982
  %v1055 = vpop.f32.mrf.mxu0
  %v1056 = vadd.f32 0.0, %v1055
  %v1057 = vpop.f32.mrf.mxu0
  %v1058 = vadd.f32 0.0, %v1057
  %1059 = vmatmul.bf16.gmra.mxu0 %v983
  %v1060 = vpop.f32.mrf.mxu0
  %v1061 = vadd.f32 0.0, %v1060
  %v1062 = vpop.f32.mrf.mxu0
  %v1063 = vadd.f32 0.0, %v1062
  %1064 = vdwg.mxu0
  %v1081 = vunpack.c.l.b16 %v860
  %v1082 = vunpack.c.h.b16 %v860
  %v1083 = vunpack.c.l.b16 %v861
  %v1084 = vunpack.c.h.b16 %v861
  %v1085 = vunpack.c.l.b16 %v862
  %v1086 = vunpack.c.h.b16 %v862
  %v1087 = vunpack.c.l.b16 %v863
  %v1088 = vunpack.c.h.b16 %v863
  %v1089 = vunpack.c.l.b16 %v864
  %v1090 = vunpack.c.h.b16 %v864
  %v1091 = vunpack.c.l.b16 %v865
  %v1092 = vunpack.c.h.b16 %v865
  %v1093 = vunpack.c.l.b16 %v866
  %v1094 = vunpack.c.h.b16 %v866
  %v1095 = vunpack.c.l.b16 %v867
  %v1096 = vunpack.c.h.b16 %v867
  %v1097 = vunpack.c.l.b16 %v868
  %v1098 = vunpack.c.h.b16 %v868
  %v1099 = vunpack.c.l.b16 %v869
  %v1100 = vunpack.c.h.b16 %v869
  %v1101 = vunpack.c.l.b16 %v870
  %v1102 = vunpack.c.h.b16 %v870
  %v1103 = vunpack.c.l.b16 %v871
  %v1104 = vunpack.c.h.b16 %v871
  %v1105 = vunpack.c.l.b16 %v872
  %v1106 = vunpack.c.h.b16 %v872
  %v1107 = vunpack.c.l.b16 %v873
  %v1108 = vunpack.c.h.b16 %v873
  %v1109 = vunpack.c.l.b16 %v874
  %v1110 = vunpack.c.h.b16 %v874
  %v1111 = vunpack.c.l.b16 %v875
  %v1112 = vunpack.c.h.b16 %v875
  %v1113 = vpack.c.b16 %v1085, %v1081
  %v1114 = vpack.c.b16 %v1086, %v1082
  %v1115 = vpack.c.b16 %v1087, %v1083
  %v1116 = vpack.c.b16 %v1088, %v1084
  %v1117 = vpack.c.b16 %v1093, %v1089
  %v1118 = vpack.c.b16 %v1094, %v1090
  %v1119 = vpack.c.b16 %v1095, %v1091
  %v1120 = vpack.c.b16 %v1096, %v1092
  %v1121 = vpack.c.b16 %v1101, %v1097
  %v1122 = vpack.c.b16 %v1102, %v1098
  %v1123 = vpack.c.b16 %v1103, %v1099
  %v1124 = vpack.c.b16 %v1104, %v1100
  %v1125 = vpack.c.b16 %v1109, %v1105
  %v1126 = vpack.c.b16 %v1110, %v1106
  %v1127 = vpack.c.b16 %v1111, %v1107
  %v1128 = vpack.c.b16 %v1112, %v1108
  %v1209 = vunpack.c.l.b16 %v876
  %v1210 = vunpack.c.l.b16 %v877
  %v1211 = vunpack.c.l.b16 %v878
  %v1212 = vunpack.c.l.b16 %v879
  %v1213 = vunpack.c.l.b16 %v880
  %v1214 = vunpack.c.l.b16 %v881
  %v1215 = vunpack.c.l.b16 %v882
  %v1216 = vunpack.c.l.b16 %v883
  %v1217 = vunpack.c.l.b16 %v884
  %v1218 = vunpack.c.l.b16 %v885
  %v1219 = vunpack.c.l.b16 %v886
  %v1220 = vunpack.c.l.b16 %v887
  %v1221 = vunpack.c.l.b16 %v888
  %v1222 = vunpack.c.l.b16 %v889
  %v1223 = vunpack.c.l.b16 %v890
  %v1224 = vunpack.c.l.b16 %v891
  %v1225 = vunpack.c.l.b16 %v892
  %v1226 = vunpack.c.l.b16 %v893
  %v1227 = vunpack.c.l.b16 %v894
  %v1228 = vunpack.c.l.b16 %v895
  %v1229 = vunpack.c.l.b16 %v896
  %v1230 = vunpack.c.l.b16 %v897
  %v1231 = vunpack.c.l.b16 %v898
  %v1232 = vunpack.c.l.b16 %v899
  %v1233 = vunpack.c.l.b16 %v900
  %v1234 = vunpack.c.l.b16 %v901
  %v1235 = vunpack.c.l.b16 %v902
  %v1236 = vunpack.c.l.b16 %v903
  %v1237 = vunpack.c.l.b16 %v904
  %v1238 = vunpack.c.l.b16 %v905
  %v1239 = vunpack.c.l.b16 %v906
  %v1240 = vunpack.c.l.b16 %v907
  %v1241 = vunpack.c.l.b16 %v908
  %v1242 = vunpack.c.l.b16 %v909
  %v1243 = vunpack.c.l.b16 %v910
  %v1244 = vunpack.c.l.b16 %v911
  %v1245 = vunpack.c.l.b16 %v912
  %v1246 = vunpack.c.l.b16 %v913
  %v1247 = vunpack.c.l.b16 %v914
  %v1248 = vunpack.c.l.b16 %v915
  %v1249 = vunpack.c.l.b16 %v916
  %v1250 = vunpack.c.l.b16 %v917
  %v1251 = vunpack.c.l.b16 %v918
  %v1252 = vunpack.c.l.b16 %v919
  %v1253 = vunpack.c.l.b16 %v920
  %v1254 = vunpack.c.l.b16 %v921
  %v1255 = vunpack.c.l.b16 %v922
  %v1256 = vunpack.c.l.b16 %v923
  %v1257 = vunpack.c.l.b16 %v924
  %v1258 = vunpack.c.l.b16 %v925
  %v1259 = vunpack.c.l.b16 %v926
  %v1260 = vunpack.c.l.b16 %v927
  %v1261 = vunpack.c.l.b16 %v928
  %v1262 = vunpack.c.l.b16 %v929
  %v1263 = vunpack.c.l.b16 %v930
  %v1264 = vunpack.c.l.b16 %v931
  %v1265 = vunpack.c.l.b16 %v932
  %v1266 = vunpack.c.l.b16 %v933
  %v1267 = vunpack.c.l.b16 %v934
  %v1268 = vunpack.c.l.b16 %v935
  %v1269 = vunpack.c.l.b16 %v936
  %v1270 = vunpack.c.l.b16 %v937
  %v1271 = vunpack.c.l.b16 %v938
  %v1272 = vunpack.c.l.b16 %v939
  %v1273 = vpack.c.b16 %v1210, %v1209
  %v1274 = vpack.c.b16 %v1212, %v1211
  %v1275 = vpack.c.b16 %v1214, %v1213
  %v1276 = vpack.c.b16 %v1216, %v1215
  %v1277 = vpack.c.b16 %v1218, %v1217
  %v1278 = vpack.c.b16 %v1220, %v1219
  %v1279 = vpack.c.b16 %v1222, %v1221
  %v1280 = vpack.c.b16 %v1224, %v1223
  %v1281 = vpack.c.b16 %v1226, %v1225
  %v1282 = vpack.c.b16 %v1228, %v1227
  %v1283 = vpack.c.b16 %v1230, %v1229
  %v1284 = vpack.c.b16 %v1232, %v1231
  %v1285 = vpack.c.b16 %v1234, %v1233
  %v1286 = vpack.c.b16 %v1236, %v1235
  %v1287 = vpack.c.b16 %v1238, %v1237
  %v1288 = vpack.c.b16 %v1240, %v1239
  %v1289 = vpack.c.b16 %v1242, %v1241
  %v1290 = vpack.c.b16 %v1244, %v1243
  %v1291 = vpack.c.b16 %v1246, %v1245
  %v1292 = vpack.c.b16 %v1248, %v1247
  %v1293 = vpack.c.b16 %v1250, %v1249
  %v1294 = vpack.c.b16 %v1252, %v1251
  %v1295 = vpack.c.b16 %v1254, %v1253
  %v1296 = vpack.c.b16 %v1256, %v1255
  %v1297 = vpack.c.b16 %v1258, %v1257
  %v1298 = vpack.c.b16 %v1260, %v1259
  %v1299 = vpack.c.b16 %v1262, %v1261
  %v1300 = vpack.c.b16 %v1264, %v1263
  %v1301 = vpack.c.b16 %v1266, %v1265
  %v1302 = vpack.c.b16 %v1268, %v1267
  %v1303 = vpack.c.b16 %v1270, %v1269
  %v1304 = vpack.c.b16 %v1272, %v1271
  %1337 = vmatpush.bf16.msra.mxu0 %v1280
  %1338 = vmatpush.bf16.msra.mxu0 %v1279
  %1339 = vmatpush.bf16.msra.mxu0 %v1278
  %1340 = vmatpush.bf16.msra.mxu0 %v1277
  %1341 = vmatpush.bf16.msra.mxu0 %v1276
  %1342 = vmatpush.bf16.msra.mxu0 %v1275
  %1343 = vmatpush.bf16.msra.mxu0 %v1274
  %1344 = vmatpush.bf16.msra.mxu0 %v1273
  %1345 = vmatmul.bf16.gmra.mxu0 %v1113
  %v1346 = vpop.f32.mrf.mxu0
  %v1347 = vadd.f32 %v1046, %v1346
  %v1348 = vpop.f32.mrf.mxu0
  %v1349 = vadd.f32 %v1048, %v1348
  %1350 = vmatmul.bf16.gmra.mxu0 %v1117
  %v1351 = vpop.f32.mrf.mxu0
  %v1352 = vadd.f32 %v1051, %v1351
  %v1353 = vpop.f32.mrf.mxu0
  %v1354 = vadd.f32 %v1053, %v1353
  %1355 = vmatmul.bf16.gmra.mxu0 %v1121
  %v1356 = vpop.f32.mrf.mxu0
  %v1357 = vadd.f32 %v1056, %v1356
  %v1358 = vpop.f32.mrf.mxu0
  %v1359 = vadd.f32 %v1058, %v1358
  %1360 = vmatmul.bf16.gmra.mxu0 %v1125
  %v1361 = vpop.f32.mrf.mxu0
  %v1362 = vadd.f32 %v1061, %v1361
  %v1363 = vpop.f32.mrf.mxu0
  %v1364 = vadd.f32 %v1063, %v1363
  %1365 = vdwg.mxu0
  %1366 = vmatpush.bf16.msra.mxu0 %v1288
  %1367 = vmatpush.bf16.msra.mxu0 %v1287
  %1368 = vmatpush.bf16.msra.mxu0 %v1286
  %1369 = vmatpush.bf16.msra.mxu0 %v1285
  %1370 = vmatpush.bf16.msra.mxu0 %v1284
  %1371 = vmatpush.bf16.msra.mxu0 %v1283
  %1372 = vmatpush.bf16.msra.mxu0 %v1282
  %1373 = vmatpush.bf16.msra.mxu0 %v1281
  %1374 = vmatmul.bf16.gmra.mxu0 %v1114
  %v1375 = vpop.f32.mrf.mxu0
  %v1376 = vadd.f32 %v1347, %v1375
  %v1377 = vpop.f32.mrf.mxu0
  %v1378 = vadd.f32 %v1349, %v1377
  %1379 = vmatmul.bf16.gmra.mxu0 %v1118
  %v1380 = vpop.f32.mrf.mxu0
  %v1381 = vadd.f32 %v1352, %v1380
  %v1382 = vpop.f32.mrf.mxu0
  %v1383 = vadd.f32 %v1354, %v1382
  %1384 = vmatmul.bf16.gmra.mxu0 %v1122
  %v1385 = vpop.f32.mrf.mxu0
  %v1386 = vadd.f32 %v1357, %v1385
  %v1387 = vpop.f32.mrf.mxu0
  %v1388 = vadd.f32 %v1359, %v1387
  %1389 = vmatmul.bf16.gmra.mxu0 %v1126
  %v1390 = vpop.f32.mrf.mxu0
  %v1391 = vadd.f32 %v1362, %v1390
  %v1392 = vpop.f32.mrf.mxu0
  %v1393 = vadd.f32 %v1364, %v1392
  %1394 = vdwg.mxu0
  %1395 = vmatpush.bf16.msra.mxu0 %v1296
  %1396 = vmatpush.bf16.msra.mxu0 %v1295
  %1397 = vmatpush.bf16.msra.mxu0 %v1294
  %1398 = vmatpush.bf16.msra.mxu0 %v1293
  %1399 = vmatpush.bf16.msra.mxu0 %v1292
  %1400 = vmatpush.bf16.msra.mxu0 %v1291
  %1401 = vmatpush.bf16.msra.mxu0 %v1290
  %1402 = vmatpush.bf16.msra.mxu0 %v1289
  %1403 = vmatmul.bf16.gmra.mxu0 %v1115
  %v1404 = vpop.f32.mrf.mxu0
  %v1405 = vadd.f32 %v1376, %v1404
  %v1406 = vpop.f32.mrf.mxu0
  %v1407 = vadd.f32 %v1378, %v1406
  %1408 = vmatmul.bf16.gmra.mxu0 %v1119
  %v1409 = vpop.f32.mrf.mxu0
  %v1410 = vadd.f32 %v1381, %v1409
  %v1411 = vpop.f32.mrf.mxu0
  %v1412 = vadd.f32 %v1383, %v1411
  %1413 = vmatmul.bf16.gmra.mxu0 %v1123
  %v1414 = vpop.f32.mrf.mxu0
  %v1415 = vadd.f32 %v1386, %v1414
  %v1416 = vpop.f32.mrf.mxu0
  %v1417 = vadd.f32 %v1388, %v1416
  %1418 = vmatmul.bf16.gmra.mxu0 %v1127
  %v1419 = vpop.f32.mrf.mxu0
  %v1420 = vadd.f32 %v1391, %v1419
  %v1421 = vpop.f32.mrf.mxu0
  %v1422 = vadd.f32 %v1393, %v1421
  %1423 = vdwg.mxu0
  %1424 = vmatpush.bf16.msra.mxu0 %v1304
  %1425 = vmatpush.bf16.msra.mxu0 %v1303
  %1426 = vmatpush.bf16.msra.mxu0 %v1302
  %1427 = vmatpush.bf16.msra.mxu0 %v1301
  %1428 = vmatpush.bf16.msra.mxu0 %v1300
  %1429 = vmatpush.bf16.msra.mxu0 %v1299
  %1430 = vmatpush.bf16.msra.mxu0 %v1298
  %1431 = vmatpush.bf16.msra.mxu0 %v1297
  %1432 = vmatmul.bf16.gmra.mxu0 %v1116
  %v1433 = vpop.f32.mrf.mxu0
  %v1434 = vadd.f32 %v1405, %v1433
  %v1435 = vpop.f32.mrf.mxu0
  %v1436 = vadd.f32 %v1407, %v1435
  %1437 = vmatmul.bf16.gmra.mxu0 %v1120
  %v1438 = vpop.f32.mrf.mxu0
  %v1439 = vadd.f32 %v1410, %v1438
  %v1440 = vpop.f32.mrf.mxu0
  %v1441 = vadd.f32 %v1412, %v1440
  %1442 = vmatmul.bf16.gmra.mxu0 %v1124
  %v1443 = vpop.f32.mrf.mxu0
  %v1444 = vadd.f32 %v1415, %v1443
  %v1445 = vpop.f32.mrf.mxu0
  %v1446 = vadd.f32 %v1417, %v1445
  %1447 = vmatmul.bf16.gmra.mxu0 %v1128
  %v1448 = vpop.f32.mrf.mxu0
  %v1449 = vadd.f32 %v1420, %v1448
  %v1450 = vpop.f32.mrf.mxu0
  %v1451 = vadd.f32 %v1422, %v1450
  %1452 = vdwg.mxu0
  %v1453 = vmax.f32 %v1434, 0.0
  %v1454 = vmax.f32 %v1436, 0.0
  %v1455 = vmax.f32 %v1439, 0.0
  %v1456 = vmax.f32 %v1441, 0.0
  %v1457 = vmax.f32 %v1444, 0.0
  %v1458 = vmax.f32 %v1446, 0.0
  %v1459 = vmax.f32 %v1449, 0.0
  %v1460 = vmax.f32 %v1451, 0.0
  %v1461 = vpack.c.bf16 %v1453, %v1453
  %v1462 = vpack.c.bf16 %v1454, %v1454
  %v1463 = vpack.c.bf16 %v1455, %v1455
  %v1464 = vpack.c.bf16 %v1456, %v1456
  %v1465 = vpack.c.bf16 %v1457, %v1457
  %v1466 = vpack.c.bf16 %v1458, %v1458
  %v1467 = vpack.c.bf16 %v1459, %v1459
  %v1468 = vpack.c.bf16 %v1460, %v1460
  %1469 = vst [vmem:[%s5] sm:$0xf] %v1461
  %1470 = vst [vmem:[%s5 + $0x4] sm:$0xf] %v1462
  %1471 = vst [vmem:[%s5 + $0x8] sm:$0xf] %v1463
  %1472 = vst [vmem:[%s5 + $0xc] sm:$0xf] %v1464
  %1473 = vst [vmem:[%s5 + $0x10] sm:$0xf] %v1465
  %1474 = vst [vmem:[%s5 + $0x14] sm:$0xf] %v1466
  %1475 = vst [vmem:[%s5 + $0x18] sm:$0xf] %v1467
  %1476 = vst [vmem:[%s5 + $0x1c] sm:$0xf] %v1468
  // Predicated region
  $region22: #{ddi_decagon_prob_forward.3} parent=0 // pred_check
    _
  $region23: #{ddi_decagon_prob_forward.3} parent=0 // pred_check_branch
    %1478 = sbr.rel (0) target = $region25
  $region24: #{ddi_decagon_prob_forward.3} parent=0 // pred_region
    _
  $region25: #{ddi_decagon_prob_forward.3} parent=0 // pred_fallthru
    _
  // Predicated region
  $region26: #{ddi_decagon_prob_forward.3} parent=0 // pred_check
    _
  $region27: #{ddi_decagon_prob_forward.3} parent=0 // pred_check_branch
    %1480 = sbr.rel (0) target = $region29
  $region28: #{ddi_decagon_prob_forward.3} parent=0 // pred_region
    _
  $region29: #{ddi_decagon_prob_forward.3} parent=0 // pred_fallthru
    _

// kernel: ddi_decagon_prob_forward.5
$region0: #{ddi_decagon_prob_forward.5}
  #allocation0 [shape = 'u32[]', space=smem, size = 0x4, offset = 0x4, fixed_abs, tag = 'smem constant byte address 0x4 - core index']
  #allocation1 [shape = 'u32[72,128]{1,0:T(1,128)}', space=vmem, size = 0x9000, scoped, tag = 'internal scratch']
  %s0 = inlined_call_operand.vmem [shape: bf16[128,128], index: 0, kind: input, shape index: {}]
  %s1 = inlined_call_operand.vmem [shape: bf16[128,128], index: 1, kind: input, shape index: {}]
  %s2 = inlined_call_operand.vmem [shape: bf16[8,128,128], index: 2, kind: input, shape index: {}]
  %s3 = inlined_call_operand.vmem [shape: f32[8,128], index: 3, kind: output, shape index: {}]
  %s4 = sld [smem:[#allocation0]]
  $region22: #{ddi_decagon_prob_forward.5} parent=0
    _
  %s6 = ssub.s32 1, %s4
  %s7 = scalar_select 0, %s6, %s4
  // Predicated region
  $region2: #{ddi_decagon_prob_forward.5} parent=0 // pred_check
    _
  $region3: #{ddi_decagon_prob_forward.5} parent=0 // pred_check_branch
    %9 = sbr.rel (0) target = $region5
  $region4: #{ddi_decagon_prob_forward.5} parent=0 // pred_region
    _
  $region5: #{ddi_decagon_prob_forward.5} parent=0 // pred_fallthru
    _
  // Predicated region
  $region6: #{ddi_decagon_prob_forward.5} parent=0 // pred_check
    _
  $region7: #{ddi_decagon_prob_forward.5} parent=0 // pred_check_branch
    %11 = sbr.rel (0) target = $region9
  $region8: #{ddi_decagon_prob_forward.5} parent=0 // pred_region
    _
  $region9: #{ddi_decagon_prob_forward.5} parent=0 // pred_fallthru
    _
  // Predicated region
  $region10: #{ddi_decagon_prob_forward.5} parent=0 // pred_check
    _
  $region11: #{ddi_decagon_prob_forward.5} parent=0 // pred_check_branch
    %13 = sbr.rel (0) target = $region13
  $region12: #{ddi_decagon_prob_forward.5} parent=0 // pred_region
    _
  $region13: #{ddi_decagon_prob_forward.5} parent=0 // pred_fallthru
    _
  %v14 = vld [vmem:[%s0] sm:$0xf]
  %v15 = vld [vmem:[%s0 + $0x4] sm:$0xf]
  %v16 = vld [vmem:[%s0 + $0x8] sm:$0xf]
  %v17 = vld [vmem:[%s0 + $0xc] sm:$0xf]
  %v18 = vld [vmem:[%s0 + $0x10] sm:$0xf]
  %v19 = vld [vmem:[%s0 + $0x14] sm:$0xf]
  %v20 = vld [vmem:[%s0 + $0x18] sm:$0xf]
  %v21 = vld [vmem:[%s0 + $0x1c] sm:$0xf]
  %v22 = vld [vmem:[%s0 + $0x20] sm:$0xf]
  %v23 = vld [vmem:[%s0 + $0x24] sm:$0xf]
  %v24 = vld [vmem:[%s0 + $0x28] sm:$0xf]
  %v25 = vld [vmem:[%s0 + $0x2c] sm:$0xf]
  %v26 = vld [vmem:[%s0 + $0x30] sm:$0xf]
  %v27 = vld [vmem:[%s0 + $0x34] sm:$0xf]
  %v28 = vld [vmem:[%s0 + $0x38] sm:$0xf]
  %v29 = vld [vmem:[%s0 + $0x3c] sm:$0xf]
  %v30 = vld [vmem:[%s1] sm:$0xf]
  %v31 = vld [vmem:[%s1 + $0x4] sm:$0xf]
  %v32 = vld [vmem:[%s1 + $0x8] sm:$0xf]
  %v33 = vld [vmem:[%s1 + $0xc] sm:$0xf]
  %v34 = vld [vmem:[%s1 + $0x10] sm:$0xf]
  %v35 = vld [vmem:[%s1 + $0x14] sm:$0xf]
  %v36 = vld [vmem:[%s1 + $0x18] sm:$0xf]
  %v37 = vld [vmem:[%s1 + $0x1c] sm:$0xf]
  %v38 = vld [vmem:[%s1 + $0x20] sm:$0xf]
  %v39 = vld [vmem:[%s1 + $0x24] sm:$0xf]
  %v40 = vld [vmem:[%s1 + $0x28] sm:$0xf]
  %v41 = vld [vmem:[%s1 + $0x2c] sm:$0xf]
  %v42 = vld [vmem:[%s1 + $0x30] sm:$0xf]
  %v43 = vld [vmem:[%s1 + $0x34] sm:$0xf]
  %v44 = vld [vmem:[%s1 + $0x38] sm:$0xf]
  %v45 = vld [vmem:[%s1 + $0x3c] sm:$0xf]
  %v46 = vunpack.c.l.bf16 %v30
  %v47 = vunpack.c.l.bf16 %v31
  %v48 = vunpack.c.l.bf16 %v32
  %v49 = vunpack.c.l.bf16 %v33
  %v50 = vunpack.c.l.bf16 %v34
  %v51 = vunpack.c.l.bf16 %v35
  %v52 = vunpack.c.l.bf16 %v36
  %v53 = vunpack.c.l.bf16 %v37
  %v54 = vunpack.c.l.bf16 %v38
  %v55 = vunpack.c.l.bf16 %v39
  %v56 = vunpack.c.l.bf16 %v40
  %v57 = vunpack.c.l.bf16 %v41
  %v58 = vunpack.c.l.bf16 %v42
  %v59 = vunpack.c.l.bf16 %v43
  %v60 = vunpack.c.l.bf16 %v44
  %v61 = vunpack.c.l.bf16 %v45
  %v62 = vld [vmem:[%s2] sm:$0xf]
  %v63 = vld [vmem:[%s2 + $0x4] sm:$0xf]
  %v64 = vld [vmem:[%s2 + $0x8] sm:$0xf]
  %v65 = vld [vmem:[%s2 + $0xc] sm:$0xf]
  %v66 = vld [vmem:[%s2 + $0x10] sm:$0xf]
  %v67 = vld [vmem:[%s2 + $0x14] sm:$0xf]
  %v68 = vld [vmem:[%s2 + $0x18] sm:$0xf]
  %v69 = vld [vmem:[%s2 + $0x1c] sm:$0xf]
  %v70 = vld [vmem:[%s2 + $0x20] sm:$0xf]
  %v71 = vld [vmem:[%s2 + $0x24] sm:$0xf]
  %v72 = vld [vmem:[%s2 + $0x28] sm:$0xf]
  %v73 = vld [vmem:[%s2 + $0x2c] sm:$0xf]
  %v74 = vld [vmem:[%s2 + $0x30] sm:$0xf]
  %v75 = vld [vmem:[%s2 + $0x34] sm:$0xf]
  %v76 = vld [vmem:[%s2 + $0x38] sm:$0xf]
  %v77 = vld [vmem:[%s2 + $0x3c] sm:$0xf]
  %v94 = vunpack.c.l.b16 %v62
  %v95 = vunpack.c.l.b16 %v63
  %v96 = vunpack.c.l.b16 %v64
  %v97 = vunpack.c.l.b16 %v65
  %v98 = vunpack.c.l.b16 %v66
  %v99 = vunpack.c.l.b16 %v67
  %v100 = vunpack.c.l.b16 %v68
  %v101 = vunpack.c.l.b16 %v69
  %v102 = vunpack.c.l.b16 %v70
  %v103 = vunpack.c.l.b16 %v71
  %v104 = vunpack.c.l.b16 %v72
  %v105 = vunpack.c.l.b16 %v73
  %v106 = vunpack.c.l.b16 %v74
  %v107 = vunpack.c.l.b16 %v75
  %v108 = vunpack.c.l.b16 %v76
  %v109 = vunpack.c.l.b16 %v77
  %v110 = vpack.c.b16 %v95, %v94
  %v111 = vpack.c.b16 %v97, %v96
  %v112 = vpack.c.b16 %v99, %v98
  %v113 = vpack.c.b16 %v101, %v100
  %v114 = vpack.c.b16 %v103, %v102
  %v115 = vpack.c.b16 %v105, %v104
  %v116 = vpack.c.b16 %v107, %v106
  %v117 = vpack.c.b16 %v109, %v108
  %v142 = vunpack.c.l.b16 %v14
  %v143 = vunpack.c.l.b16 %v15
  %v144 = vunpack.c.l.b16 %v16
  %v145 = vunpack.c.l.b16 %v17
  %v146 = vunpack.c.l.b16 %v18
  %v147 = vunpack.c.l.b16 %v19
  %v148 = vunpack.c.l.b16 %v20
  %v149 = vunpack.c.l.b16 %v21
  %v150 = vunpack.c.l.b16 %v22
  %v151 = vunpack.c.l.b16 %v23
  %v152 = vunpack.c.l.b16 %v24
  %v153 = vunpack.c.l.b16 %v25
  %v154 = vunpack.c.l.b16 %v26
  %v155 = vunpack.c.l.b16 %v27
  %v156 = vunpack.c.l.b16 %v28
  %v157 = vunpack.c.l.b16 %v29
  %v158 = vpack.c.b16 %v143, %v142
  %v159 = vpack.c.b16 %v145, %v144
  %v160 = vpack.c.b16 %v147, %v146
  %v161 = vpack.c.b16 %v149, %v148
  %v162 = vpack.c.b16 %v151, %v150
  %v163 = vpack.c.b16 %v153, %v152
  %v164 = vpack.c.b16 %v155, %v154
  %v165 = vpack.c.b16 %v157, %v156
  %174 = vmatpush.bf16.msra.mxu0 %v165
  %175 = vmatpush.bf16.msra.mxu0 %v164
  %176 = vmatpush.bf16.msra.mxu0 %v163
  %177 = vmatpush.bf16.msra.mxu0 %v162
  %178 = vmatpush.bf16.msra.mxu0 %v161
  %179 = vmatpush.bf16.msra.mxu0 %v160
  %180 = vmatpush.bf16.msra.mxu0 %v159
  %181 = vmatpush.bf16.msra.mxu0 %v158
  %182 = vmatmul.bf16.gmra.mxu0 %v110
  %v183 = vpop.f32.mrf.mxu0
  %v184 = vadd.f32 0.0, %v183
  %v185 = vpop.f32.mrf.mxu0
  %v186 = vadd.f32 0.0, %v185
  %187 = vmatmul.bf16.gmra.mxu0 %v111
  %v188 = vpop.f32.mrf.mxu0
  %v189 = vadd.f32 0.0, %v188
  %v190 = vpop.f32.mrf.mxu0
  %v191 = vadd.f32 0.0, %v190
  %192 = vmatmul.bf16.gmra.mxu0 %v112
  %v193 = vpop.f32.mrf.mxu0
  %v194 = vadd.f32 0.0, %v193
  %v195 = vpop.f32.mrf.mxu0
  %v196 = vadd.f32 0.0, %v195
  %197 = vmatmul.bf16.gmra.mxu0 %v113
  %v198 = vpop.f32.mrf.mxu0
  %v199 = vadd.f32 0.0, %v198
  %v200 = vpop.f32.mrf.mxu0
  %v201 = vadd.f32 0.0, %v200
  %202 = vmatmul.bf16.gmra.mxu0 %v114
  %v203 = vpop.f32.mrf.mxu0
  %v204 = vadd.f32 0.0, %v203
  %v205 = vpop.f32.mrf.mxu0
  %v206 = vadd.f32 0.0, %v205
  %207 = vmatmul.bf16.gmra.mxu0 %v115
  %v208 = vpop.f32.mrf.mxu0
  %v209 = vadd.f32 0.0, %v208
  %v210 = vpop.f32.mrf.mxu0
  %v211 = vadd.f32 0.0, %v210
  %212 = vmatmul.bf16.gmra.mxu0 %v116
  %v213 = vpop.f32.mrf.mxu0
  %v214 = vadd.f32 0.0, %v213
  %v215 = vpop.f32.mrf.mxu0
  %v216 = vadd.f32 0.0, %v215
  %217 = vmatmul.bf16.gmra.mxu0 %v117
  %v218 = vpop.f32.mrf.mxu0
  %v219 = vadd.f32 0.0, %v218
  %v220 = vpop.f32.mrf.mxu0
  %v221 = vadd.f32 0.0, %v220
  %222 = vdwg.mxu0
  %v223 = vmul.f32 %v184, %v46
  %v224 = vmul.f32 %v186, %v47
  %v225 = vmul.f32 %v189, %v48
  %v226 = vmul.f32 %v191, %v49
  %v227 = vmul.f32 %v194, %v50
  %v228 = vmul.f32 %v196, %v51
  %v229 = vmul.f32 %v199, %v52
  %v230 = vmul.f32 %v201, %v53
  %v231 = vmul.f32 %v204, %v54
  %v232 = vmul.f32 %v206, %v55
  %v233 = vmul.f32 %v209, %v56
  %v234 = vmul.f32 %v211, %v57
  %v235 = vmul.f32 %v214, %v58
  %v236 = vmul.f32 %v216, %v59
  %v237 = vmul.f32 %v219, %v60
  %v238 = vmul.f32 %v221, %v61
  %v239 = vadd.f32 %v223, %v224
  %v240 = vadd.f32 %v239, %v225
  %v241 = vadd.f32 %v240, %v226
  %v242 = vadd.f32 %v241, %v227
  %v243 = vadd.f32 %v242, %v228
  %v244 = vadd.f32 %v243, %v229
  %v245 = vadd.f32 %v244, %v230
  %v246 = vadd.f32 %v245, %v231
  %v247 = vadd.f32 %v246, %v232
  %v248 = vadd.f32 %v247, %v233
  %v249 = vadd.f32 %v248, %v234
  %v250 = vadd.f32 %v249, %v235
  %v251 = vadd.f32 %v250, %v236
  %v252 = vadd.f32 %v251, %v237
  %v253 = vadd.f32 %v252, %v238
  %v254 = vrot.slane %v253, 4
  %v255 = vadd.f32 %v253, %v254
  %v256 = vrot.slane %v255, 2
  %v257 = vadd.f32 %v255, %v256
  %v258 = vrot.slane %v257, 1
  %v259 = vadd.f32 %v257, %v258
  %v260 = vxor.u32 %v259, 2147483648
  %v261 = vmul.f32 %v260, 1.442695
  %v262 = vpow.pop %v261
  %v263 = vadd.f32 %v262, 1.0
  %v264 = vrcp.pop %v263
  %v265 = vmul.f32 %v263, %v264
  %v266 = vsub.f32 1.0, %v265
  %v267 = vmul.f32 %v264, %v266
  %v268 = vadd.f32 %v264, %v267
  %vm269 = vweird.f32 %v263
  %vm270 = vweird.f32 %v264
  %vm271 = vmor %vm269, %vm270
  %v272 = vsel %vm271, %v264, %v268
  %v273 = vand.u32 2147483647, %v263
  %vm274 = vcmp.eq.f32.partialorder %v273, 8.507059e+37
  %v275 = vand.u32 %v263, 2147483648
  %v276 = vor.u32 1.1754944e-38, %v275
  %v277 = vsel %vm274, %v276, %v272
  %v278 = vmul.f32 1.0, %v277
  %279 = vst [vmem:[%s3] sm:$0x1] %v278
  %s280 = scalar_lea.vmem %s2, 64
  %v281 = vld [vmem:[%s280] sm:$0xf]
  %v282 = vld [vmem:[%s280 + $0x4] sm:$0xf]
  %v283 = vld [vmem:[%s280 + $0x8] sm:$0xf]
  %v284 = vld [vmem:[%s280 + $0xc] sm:$0xf]
  %v285 = vld [vmem:[%s280 + $0x10] sm:$0xf]
  %v286 = vld [vmem:[%s280 + $0x14] sm:$0xf]
  %v287 = vld [vmem:[%s280 + $0x18] sm:$0xf]
  %v288 = vld [vmem:[%s280 + $0x1c] sm:$0xf]
  %v289 = vld [vmem:[%s280 + $0x20] sm:$0xf]
  %v290 = vld [vmem:[%s280 + $0x24] sm:$0xf]
  %v291 = vld [vmem:[%s280 + $0x28] sm:$0xf]
  %v292 = vld [vmem:[%s280 + $0x2c] sm:$0xf]
  %v293 = vld [vmem:[%s280 + $0x30] sm:$0xf]
  %v294 = vld [vmem:[%s280 + $0x34] sm:$0xf]
  %v295 = vld [vmem:[%s280 + $0x38] sm:$0xf]
  %v296 = vld [vmem:[%s280 + $0x3c] sm:$0xf]
  %v313 = vunpack.c.l.b16 %v281
  %v314 = vunpack.c.l.b16 %v282
  %v315 = vunpack.c.l.b16 %v283
  %v316 = vunpack.c.l.b16 %v284
  %v317 = vunpack.c.l.b16 %v285
  %v318 = vunpack.c.l.b16 %v286
  %v319 = vunpack.c.l.b16 %v287
  %v320 = vunpack.c.l.b16 %v288
  %v321 = vunpack.c.l.b16 %v289
  %v322 = vunpack.c.l.b16 %v290
  %v323 = vunpack.c.l.b16 %v291
  %v324 = vunpack.c.l.b16 %v292
  %v325 = vunpack.c.l.b16 %v293
  %v326 = vunpack.c.l.b16 %v294
  %v327 = vunpack.c.l.b16 %v295
  %v328 = vunpack.c.l.b16 %v296
  %v329 = vpack.c.b16 %v314, %v313
  %v330 = vpack.c.b16 %v316, %v315
  %v331 = vpack.c.b16 %v318, %v317
  %v332 = vpack.c.b16 %v320, %v319
  %v333 = vpack.c.b16 %v322, %v321
  %v334 = vpack.c.b16 %v324, %v323
  %v335 = vpack.c.b16 %v326, %v325
  %v336 = vpack.c.b16 %v328, %v327
  %345 = vmatpush.bf16.msra.mxu0 %v165
  %346 = vmatpush.bf16.msra.mxu0 %v164
  %347 = vmatpush.bf16.msra.mxu0 %v163
  %348 = vmatpush.bf16.msra.mxu0 %v162
  %349 = vmatpush.bf16.msra.mxu0 %v161
  %350 = vmatpush.bf16.msra.mxu0 %v160
  %351 = vmatpush.bf16.msra.mxu0 %v159
  %352 = vmatpush.bf16.msra.mxu0 %v158
  %353 = vmatmul.bf16.gmra.mxu0 %v329
  %v354 = vpop.f32.mrf.mxu0
  %v355 = vadd.f32 0.0, %v354
  %v356 = vpop.f32.mrf.mxu0
  %v357 = vadd.f32 0.0, %v356
  %358 = vmatmul.bf16.gmra.mxu0 %v330
  %v359 = vpop.f32.mrf.mxu0
  %v360 = vadd.f32 0.0, %v359
  %v361 = vpop.f32.mrf.mxu0
  %v362 = vadd.f32 0.0, %v361
  %363 = vmatmul.bf16.gmra.mxu0 %v331
  %v364 = vpop.f32.mrf.mxu0
  %v365 = vadd.f32 0.0, %v364
  %v366 = vpop.f32.mrf.mxu0
  %v367 = vadd.f32 0.0, %v366
  %368 = vmatmul.bf16.gmra.mxu0 %v332
  %v369 = vpop.f32.mrf.mxu0
  %v370 = vadd.f32 0.0, %v369
  %v371 = vpop.f32.mrf.mxu0
  %v372 = vadd.f32 0.0, %v371
  %373 = vmatmul.bf16.gmra.mxu0 %v333
  %v374 = vpop.f32.mrf.mxu0
  %v375 = vadd.f32 0.0, %v374
  %v376 = vpop.f32.mrf.mxu0
  %v377 = vadd.f32 0.0, %v376
  %378 = vmatmul.bf16.gmra.mxu0 %v334
  %v379 = vpop.f32.mrf.mxu0
  %v380 = vadd.f32 0.0, %v379
  %v381 = vpop.f32.mrf.mxu0
  %v382 = vadd.f32 0.0, %v381
  %383 = vmatmul.bf16.gmra.mxu0 %v335
  %v384 = vpop.f32.mrf.mxu0
  %v385 = vadd.f32 0.0, %v384
  %v386 = vpop.f32.mrf.mxu0
  %v387 = vadd.f32 0.0, %v386
  %388 = vmatmul.bf16.gmra.mxu0 %v336
  %v389 = vpop.f32.mrf.mxu0
  %v390 = vadd.f32 0.0, %v389
  %v391 = vpop.f32.mrf.mxu0
  %v392 = vadd.f32 0.0, %v391
  %393 = vdwg.mxu0
  %v394 = vmul.f32 %v355, %v46
  %v395 = vmul.f32 %v357, %v47
  %v396 = vmul.f32 %v360, %v48
  %v397 = vmul.f32 %v362, %v49
  %v398 = vmul.f32 %v365, %v50
  %v399 = vmul.f32 %v367, %v51
  %v400 = vmul.f32 %v370, %v52
  %v401 = vmul.f32 %v372, %v53
  %v402 = vmul.f32 %v375, %v54
  %v403 = vmul.f32 %v377, %v55
  %v404 = vmul.f32 %v380, %v56
  %v405 = vmul.f32 %v382, %v57
  %v406 = vmul.f32 %v385, %v58
  %v407 = vmul.f32 %v387, %v59
  %v408 = vmul.f32 %v390, %v60
  %v409 = vmul.f32 %v392, %v61
  %v410 = vadd.f32 %v394, %v395
  %v411 = vadd.f32 %v410, %v396
  %v412 = vadd.f32 %v411, %v397
  %v413 = vadd.f32 %v412, %v398
  %v414 = vadd.f32 %v413, %v399
  %v415 = vadd.f32 %v414, %v400
  %v416 = vadd.f32 %v415, %v401
  %v417 = vadd.f32 %v416, %v402
  %v418 = vadd.f32 %v417, %v403
  %v419 = vadd.f32 %v418, %v404
  %v420 = vadd.f32 %v419, %v405
  %v421 = vadd.f32 %v420, %v406
  %v422 = vadd.f32 %v421, %v407
  %v423 = vadd.f32 %v422, %v408
  %v424 = vadd.f32 %v423, %v409
  %v425 = vrot.slane %v424, 4
  %v426 = vadd.f32 %v424, %v425
  %v427 = vrot.slane %v426, 2
  %v428 = vadd.f32 %v426, %v427
  %v429 = vrot.slane %v428, 1
  %v430 = vadd.f32 %v428, %v429
  %v431 = vxor.u32 %v430, 2147483648
  %v432 = vmul.f32 %v431, 1.442695
  %v433 = vpow.pop %v432
  %v434 = vadd.f32 %v433, 1.0
  %v435 = vrcp.pop %v434
  %v436 = vmul.f32 %v434, %v435
  %v437 = vsub.f32 1.0, %v436
  %v438 = vmul.f32 %v435, %v437
  %v439 = vadd.f32 %v435, %v438
  %vm440 = vweird.f32 %v434
  %vm441 = vweird.f32 %v435
  %vm442 = vmor %vm440, %vm441
  %v443 = vsel %vm442, %v435, %v439
  %v444 = vand.u32 2147483647, %v434
  %vm445 = vcmp.eq.f32.partialorder %v444, 8.507059e+37
  %v446 = vand.u32 %v434, 2147483648
  %v447 = vor.u32 1.1754944e-38, %v446
  %v448 = vsel %vm445, %v447, %v443
  %v449 = vmul.f32 1.0, %v448
  %450 = vst [vmem:[%s3 + $0x1] sm:$0x1] %v449
  %s451 = scalar_lea.vmem %s2, 128
  %v452 = vld [vmem:[%s451] sm:$0xf]
  %v453 = vld [vmem:[%s451 + $0x4] sm:$0xf]
  %v454 = vld [vmem:[%s451 + $0x8] sm:$0xf]
  %v455 = vld [vmem:[%s451 + $0xc] sm:$0xf]
  %v456 = vld [vmem:[%s451 + $0x10] sm:$0xf]
  %v457 = vld [vmem:[%s451 + $0x14] sm:$0xf]
  %v458 = vld [vmem:[%s451 + $0x18] sm:$0xf]
  %v459 = vld [vmem:[%s451 + $0x1c] sm:$0xf]
  %v460 = vld [vmem:[%s451 + $0x20] sm:$0xf]
  %v461 = vld [vmem:[%s451 + $0x24] sm:$0xf]
  %v462 = vld [vmem:[%s451 + $0x28] sm:$0xf]
  %v463 = vld [vmem:[%s451 + $0x2c] sm:$0xf]
  %v464 = vld [vmem:[%s451 + $0x30] sm:$0xf]
  %v465 = vld [vmem:[%s451 + $0x34] sm:$0xf]
  %v466 = vld [vmem:[%s451 + $0x38] sm:$0xf]
  %v467 = vld [vmem:[%s451 + $0x3c] sm:$0xf]
  %v484 = vunpack.c.l.b16 %v452
  %v485 = vunpack.c.l.b16 %v453
  %v486 = vunpack.c.l.b16 %v454
  %v487 = vunpack.c.l.b16 %v455
  %v488 = vunpack.c.l.b16 %v456
  %v489 = vunpack.c.l.b16 %v457
  %v490 = vunpack.c.l.b16 %v458
  %v491 = vunpack.c.l.b16 %v459
  %v492 = vunpack.c.l.b16 %v460
  %v493 = vunpack.c.l.b16 %v461
  %v494 = vunpack.c.l.b16 %v462
  %v495 = vunpack.c.l.b16 %v463
  %v496 = vunpack.c.l.b16 %v464
  %v497 = vunpack.c.l.b16 %v465
  %v498 = vunpack.c.l.b16 %v466
  %v499 = vunpack.c.l.b16 %v467
  %v500 = vpack.c.b16 %v485, %v484
  %v501 = vpack.c.b16 %v487, %v486
  %v502 = vpack.c.b16 %v489, %v488
  %v503 = vpack.c.b16 %v491, %v490
  %v504 = vpack.c.b16 %v493, %v492
  %v505 = vpack.c.b16 %v495, %v494
  %v506 = vpack.c.b16 %v497, %v496
  %v507 = vpack.c.b16 %v499, %v498
  %516 = vmatpush.bf16.msra.mxu0 %v165
  %517 = vmatpush.bf16.msra.mxu0 %v164
  %518 = vmatpush.bf16.msra.mxu0 %v163
  %519 = vmatpush.bf16.msra.mxu0 %v162
  %520 = vmatpush.bf16.msra.mxu0 %v161
  %521 = vmatpush.bf16.msra.mxu0 %v160
  %522 = vmatpush.bf16.msra.mxu0 %v159
  %523 = vmatpush.bf16.msra.mxu0 %v158
  %524 = vmatmul.bf16.gmra.mxu0 %v500
  %v525 = vpop.f32.mrf.mxu0
  %v526 = vadd.f32 0.0, %v525
  %v527 = vpop.f32.mrf.mxu0
  %v528 = vadd.f32 0.0, %v527
  %529 = vmatmul.bf16.gmra.mxu0 %v501
  %v530 = vpop.f32.mrf.mxu0
  %v531 = vadd.f32 0.0, %v530
  %v532 = vpop.f32.mrf.mxu0
  %v533 = vadd.f32 0.0, %v532
  %534 = vmatmul.bf16.gmra.mxu0 %v502
  %v535 = vpop.f32.mrf.mxu0
  %v536 = vadd.f32 0.0, %v535
  %v537 = vpop.f32.mrf.mxu0
  %v538 = vadd.f32 0.0, %v537
  %539 = vmatmul.bf16.gmra.mxu0 %v503
  %v540 = vpop.f32.mrf.mxu0
  %v541 = vadd.f32 0.0, %v540
  %v542 = vpop.f32.mrf.mxu0
  %v543 = vadd.f32 0.0, %v542
  %544 = vmatmul.bf16.gmra.mxu0 %v504
  %v545 = vpop.f32.mrf.mxu0
  %v546 = vadd.f32 0.0, %v545
  %v547 = vpop.f32.mrf.mxu0
  %v548 = vadd.f32 0.0, %v547
  %549 = vmatmul.bf16.gmra.mxu0 %v505
  %v550 = vpop.f32.mrf.mxu0
  %v551 = vadd.f32 0.0, %v550
  %v552 = vpop.f32.mrf.mxu0
  %v553 = vadd.f32 0.0, %v552
  %554 = vmatmul.bf16.gmra.mxu0 %v506
  %v555 = vpop.f32.mrf.mxu0
  %v556 = vadd.f32 0.0, %v555
  %v557 = vpop.f32.mrf.mxu0
  %v558 = vadd.f32 0.0, %v557
  %559 = vmatmul.bf16.gmra.mxu0 %v507
  %v560 = vpop.f32.mrf.mxu0
  %v561 = vadd.f32 0.0, %v560
  %v562 = vpop.f32.mrf.mxu0
  %v563 = vadd.f32 0.0, %v562
  %564 = vdwg.mxu0
  %v565 = vmul.f32 %v526, %v46
  %v566 = vmul.f32 %v528, %v47
  %v567 = vmul.f32 %v531, %v48
  %v568 = vmul.f32 %v533, %v49
  %v569 = vmul.f32 %v536, %v50
  %v570 = vmul.f32 %v538, %v51
  %v571 = vmul.f32 %v541, %v52
  %v572 = vmul.f32 %v543, %v53
  %v573 = vmul.f32 %v546, %v54
  %v574 = vmul.f32 %v548, %v55
  %v575 = vmul.f32 %v551, %v56
  %v576 = vmul.f32 %v553, %v57
  %v577 = vmul.f32 %v556, %v58
  %v578 = vmul.f32 %v558, %v59
  %v579 = vmul.f32 %v561, %v60
  %v580 = vmul.f32 %v563, %v61
  %v581 = vadd.f32 %v565, %v566
  %v582 = vadd.f32 %v581, %v567
  %v583 = vadd.f32 %v582, %v568
  %v584 = vadd.f32 %v583, %v569
  %v585 = vadd.f32 %v584, %v570
  %v586 = vadd.f32 %v585, %v571
  %v587 = vadd.f32 %v586, %v572
  %v588 = vadd.f32 %v587, %v573
  %v589 = vadd.f32 %v588, %v574
  %v590 = vadd.f32 %v589, %v575
  %v591 = vadd.f32 %v590, %v576
  %v592 = vadd.f32 %v591, %v577
  %v593 = vadd.f32 %v592, %v578
  %v594 = vadd.f32 %v593, %v579
  %v595 = vadd.f32 %v594, %v580
  %v596 = vrot.slane %v595, 4
  %v597 = vadd.f32 %v595, %v596
  %v598 = vrot.slane %v597, 2
  %v599 = vadd.f32 %v597, %v598
  %v600 = vrot.slane %v599, 1
  %v601 = vadd.f32 %v599, %v600
  %v602 = vxor.u32 %v601, 2147483648
  %v603 = vmul.f32 %v602, 1.442695
  %v604 = vpow.pop %v603
  %v605 = vadd.f32 %v604, 1.0
  %v606 = vrcp.pop %v605
  %v607 = vmul.f32 %v605, %v606
  %v608 = vsub.f32 1.0, %v607
  %v609 = vmul.f32 %v606, %v608
  %v610 = vadd.f32 %v606, %v609
  %vm611 = vweird.f32 %v605
  %vm612 = vweird.f32 %v606
  %vm613 = vmor %vm611, %vm612
  %v614 = vsel %vm613, %v606, %v610
  %v615 = vand.u32 2147483647, %v605
  %vm616 = vcmp.eq.f32.partialorder %v615, 8.507059e+37
  %v617 = vand.u32 %v605, 2147483648
  %v618 = vor.u32 1.1754944e-38, %v617
  %v619 = vsel %vm616, %v618, %v614
  %v620 = vmul.f32 1.0, %v619
  %621 = vst [vmem:[%s3 + $0x2] sm:$0x1] %v620
  %s622 = scalar_lea.vmem %s2, 192
  %v623 = vld [vmem:[%s622] sm:$0xf]
  %v624 = vld [vmem:[%s622 + $0x4] sm:$0xf]
  %v625 = vld [vmem:[%s622 + $0x8] sm:$0xf]
  %v626 = vld [vmem:[%s622 + $0xc] sm:$0xf]
  %v627 = vld [vmem:[%s622 + $0x10] sm:$0xf]
  %v628 = vld [vmem:[%s622 + $0x14] sm:$0xf]
  %v629 = vld [vmem:[%s622 + $0x18] sm:$0xf]
  %v630 = vld [vmem:[%s622 + $0x1c] sm:$0xf]
  %v631 = vld [vmem:[%s622 + $0x20] sm:$0xf]
  %v632 = vld [vmem:[%s622 + $0x24] sm:$0xf]
  %v633 = vld [vmem:[%s622 + $0x28] sm:$0xf]
  %v634 = vld [vmem:[%s622 + $0x2c] sm:$0xf]
  %v635 = vld [vmem:[%s622 + $0x30] sm:$0xf]
  %v636 = vld [vmem:[%s622 + $0x34] sm:$0xf]
  %v637 = vld [vmem:[%s622 + $0x38] sm:$0xf]
  %v638 = vld [vmem:[%s622 + $0x3c] sm:$0xf]
  %v655 = vunpack.c.l.b16 %v623
  %v656 = vunpack.c.l.b16 %v624
  %v657 = vunpack.c.l.b16 %v625
  %v658 = vunpack.c.l.b16 %v626
  %v659 = vunpack.c.l.b16 %v627
  %v660 = vunpack.c.l.b16 %v628
  %v661 = vunpack.c.l.b16 %v629
  %v662 = vunpack.c.l.b16 %v630
  %v663 = vunpack.c.l.b16 %v631
  %v664 = vunpack.c.l.b16 %v632
  %v665 = vunpack.c.l.b16 %v633
  %v666 = vunpack.c.l.b16 %v634
  %v667 = vunpack.c.l.b16 %v635
  %v668 = vunpack.c.l.b16 %v636
  %v669 = vunpack.c.l.b16 %v637
  %v670 = vunpack.c.l.b16 %v638
  %v671 = vpack.c.b16 %v656, %v655
  %v672 = vpack.c.b16 %v658, %v657
  %v673 = vpack.c.b16 %v660, %v659
  %v674 = vpack.c.b16 %v662, %v661
  %v675 = vpack.c.b16 %v664, %v663
  %v676 = vpack.c.b16 %v666, %v665
  %v677 = vpack.c.b16 %v668, %v667
  %v678 = vpack.c.b16 %v670, %v669
  %687 = vmatpush.bf16.msra.mxu0 %v165
  %688 = vmatpush.bf16.msra.mxu0 %v164
  %689 = vmatpush.bf16.msra.mxu0 %v163
  %690 = vmatpush.bf16.msra.mxu0 %v162
  %691 = vmatpush.bf16.msra.mxu0 %v161
  %692 = vmatpush.bf16.msra.mxu0 %v160
  %693 = vmatpush.bf16.msra.mxu0 %v159
  %694 = vmatpush.bf16.msra.mxu0 %v158
  %695 = vmatmul.bf16.gmra.mxu0 %v671
  %v696 = vpop.f32.mrf.mxu0
  %v697 = vadd.f32 0.0, %v696
  %v698 = vpop.f32.mrf.mxu0
  %v699 = vadd.f32 0.0, %v698
  %700 = vmatmul.bf16.gmra.mxu0 %v672
  %v701 = vpop.f32.mrf.mxu0
  %v702 = vadd.f32 0.0, %v701
  %v703 = vpop.f32.mrf.mxu0
  %v704 = vadd.f32 0.0, %v703
  %705 = vmatmul.bf16.gmra.mxu0 %v673
  %v706 = vpop.f32.mrf.mxu0
  %v707 = vadd.f32 0.0, %v706
  %v708 = vpop.f32.mrf.mxu0
  %v709 = vadd.f32 0.0, %v708
  %710 = vmatmul.bf16.gmra.mxu0 %v674
  %v711 = vpop.f32.mrf.mxu0
  %v712 = vadd.f32 0.0, %v711
  %v713 = vpop.f32.mrf.mxu0
  %v714 = vadd.f32 0.0, %v713
  %715 = vmatmul.bf16.gmra.mxu0 %v675
  %v716 = vpop.f32.mrf.mxu0
  %v717 = vadd.f32 0.0, %v716
  %v718 = vpop.f32.mrf.mxu0
  %v719 = vadd.f32 0.0, %v718
  %720 = vmatmul.bf16.gmra.mxu0 %v676
  %v721 = vpop.f32.mrf.mxu0
  %v722 = vadd.f32 0.0, %v721
  %v723 = vpop.f32.mrf.mxu0
  %v724 = vadd.f32 0.0, %v723
  %725 = vmatmul.bf16.gmra.mxu0 %v677
  %v726 = vpop.f32.mrf.mxu0
  %v727 = vadd.f32 0.0, %v726
  %v728 = vpop.f32.mrf.mxu0
  %v729 = vadd.f32 0.0, %v728
  %730 = vmatmul.bf16.gmra.mxu0 %v678
  %v731 = vpop.f32.mrf.mxu0
  %v732 = vadd.f32 0.0, %v731
  %v733 = vpop.f32.mrf.mxu0
  %v734 = vadd.f32 0.0, %v733
  %735 = vdwg.mxu0
  %v736 = vmul.f32 %v697, %v46
  %v737 = vmul.f32 %v699, %v47
  %v738 = vmul.f32 %v702, %v48
  %v739 = vmul.f32 %v704, %v49
  %v740 = vmul.f32 %v707, %v50
  %v741 = vmul.f32 %v709, %v51
  %v742 = vmul.f32 %v712, %v52
  %v743 = vmul.f32 %v714, %v53
  %v744 = vmul.f32 %v717, %v54
  %v745 = vmul.f32 %v719, %v55
  %v746 = vmul.f32 %v722, %v56
  %v747 = vmul.f32 %v724, %v57
  %v748 = vmul.f32 %v727, %v58
  %v749 = vmul.f32 %v729, %v59
  %v750 = vmul.f32 %v732, %v60
  %v751 = vmul.f32 %v734, %v61
  %v752 = vadd.f32 %v736, %v737
  %v753 = vadd.f32 %v752, %v738
  %v754 = vadd.f32 %v753, %v739
  %v755 = vadd.f32 %v754, %v740
  %v756 = vadd.f32 %v755, %v741
  %v757 = vadd.f32 %v756, %v742
  %v758 = vadd.f32 %v757, %v743
  %v759 = vadd.f32 %v758, %v744
  %v760 = vadd.f32 %v759, %v745
  %v761 = vadd.f32 %v760, %v746
  %v762 = vadd.f32 %v761, %v747
  %v763 = vadd.f32 %v762, %v748
  %v764 = vadd.f32 %v763, %v749
  %v765 = vadd.f32 %v764, %v750
  %v766 = vadd.f32 %v765, %v751
  %v767 = vrot.slane %v766, 4
  %v768 = vadd.f32 %v766, %v767
  %v769 = vrot.slane %v768, 2
  %v770 = vadd.f32 %v768, %v769
  %v771 = vrot.slane %v770, 1
  %v772 = vadd.f32 %v770, %v771
  %v773 = vxor.u32 %v772, 2147483648
  %v774 = vmul.f32 %v773, 1.442695
  %v775 = vpow.pop %v774
  %v776 = vadd.f32 %v775, 1.0
  %v777 = vrcp.pop %v776
  %v778 = vmul.f32 %v776, %v777
  %v779 = vsub.f32 1.0, %v778
  %v780 = vmul.f32 %v777, %v779
  %v781 = vadd.f32 %v777, %v780
  %vm782 = vweird.f32 %v776
  %vm783 = vweird.f32 %v777
  %vm784 = vmor %vm782, %vm783
  %v785 = vsel %vm784, %v777, %v781
  %v786 = vand.u32 2147483647, %v776
  %vm787 = vcmp.eq.f32.partialorder %v786, 8.507059e+37
  %v788 = vand.u32 %v776, 2147483648
  %v789 = vor.u32 1.1754944e-38, %v788
  %v790 = vsel %vm787, %v789, %v785
  %v791 = vmul.f32 1.0, %v790
  %792 = vst [vmem:[%s3 + $0x3] sm:$0x1] %v791
  %s793 = scalar_lea.vmem %s2, 256
  %v794 = vld [vmem:[%s793] sm:$0xf]
  %v795 = vld [vmem:[%s793 + $0x4] sm:$0xf]
  %v796 = vld [vmem:[%s793 + $0x8] sm:$0xf]
  %v797 = vld [vmem:[%s793 + $0xc] sm:$0xf]
  %v798 = vld [vmem:[%s793 + $0x10] sm:$0xf]
  %v799 = vld [vmem:[%s793 + $0x14] sm:$0xf]
  %v800 = vld [vmem:[%s793 + $0x18] sm:$0xf]
  %v801 = vld [vmem:[%s793 + $0x1c] sm:$0xf]
  %v802 = vld [vmem:[%s793 + $0x20] sm:$0xf]
  %v803 = vld [vmem:[%s793 + $0x24] sm:$0xf]
  %v804 = vld [vmem:[%s793 + $0x28] sm:$0xf]
  %v805 = vld [vmem:[%s793 + $0x2c] sm:$0xf]
  %v806 = vld [vmem:[%s793 + $0x30] sm:$0xf]
  %v807 = vld [vmem:[%s793 + $0x34] sm:$0xf]
  %v808 = vld [vmem:[%s793 + $0x38] sm:$0xf]
  %v809 = vld [vmem:[%s793 + $0x3c] sm:$0xf]
  %v826 = vunpack.c.l.b16 %v794
  %v827 = vunpack.c.l.b16 %v795
  %v828 = vunpack.c.l.b16 %v796
  %v829 = vunpack.c.l.b16 %v797
  %v830 = vunpack.c.l.b16 %v798
  %v831 = vunpack.c.l.b16 %v799
  %v832 = vunpack.c.l.b16 %v800
  %v833 = vunpack.c.l.b16 %v801
  %v834 = vunpack.c.l.b16 %v802
  %v835 = vunpack.c.l.b16 %v803
  %v836 = vunpack.c.l.b16 %v804
  %v837 = vunpack.c.l.b16 %v805
  %v838 = vunpack.c.l.b16 %v806
  %v839 = vunpack.c.l.b16 %v807
  %v840 = vunpack.c.l.b16 %v808
  %v841 = vunpack.c.l.b16 %v809
  %v842 = vpack.c.b16 %v827, %v826
  %v843 = vpack.c.b16 %v829, %v828
  %v844 = vpack.c.b16 %v831, %v830
  %v845 = vpack.c.b16 %v833, %v832
  %v846 = vpack.c.b16 %v835, %v834
  %v847 = vpack.c.b16 %v837, %v836
  %v848 = vpack.c.b16 %v839, %v838
  %v849 = vpack.c.b16 %v841, %v840
  %858 = vmatpush.bf16.msra.mxu0 %v165
  %859 = vmatpush.bf16.msra.mxu0 %v164
  %860 = vmatpush.bf16.msra.mxu0 %v163
  %861 = vmatpush.bf16.msra.mxu0 %v162
  %862 = vmatpush.bf16.msra.mxu0 %v161
  %863 = vmatpush.bf16.msra.mxu0 %v160
  %864 = vmatpush.bf16.msra.mxu0 %v159
  %865 = vmatpush.bf16.msra.mxu0 %v158
  %866 = vmatmul.bf16.gmra.mxu0 %v842
  %v867 = vpop.f32.mrf.mxu0
  %v868 = vadd.f32 0.0, %v867
  %v869 = vpop.f32.mrf.mxu0
  %v870 = vadd.f32 0.0, %v869
  %871 = vmatmul.bf16.gmra.mxu0 %v843
  %v872 = vpop.f32.mrf.mxu0
  %v873 = vadd.f32 0.0, %v872
  %v874 = vpop.f32.mrf.mxu0
  %v875 = vadd.f32 0.0, %v874
  %876 = vmatmul.bf16.gmra.mxu0 %v844
  %v877 = vpop.f32.mrf.mxu0
  %v878 = vadd.f32 0.0, %v877
  %v879 = vpop.f32.mrf.mxu0
  %v880 = vadd.f32 0.0, %v879
  %881 = vmatmul.bf16.gmra.mxu0 %v845
  %v882 = vpop.f32.mrf.mxu0
  %v883 = vadd.f32 0.0, %v882
  %v884 = vpop.f32.mrf.mxu0
  %v885 = vadd.f32 0.0, %v884
  %886 = vmatmul.bf16.gmra.mxu0 %v846
  %v887 = vpop.f32.mrf.mxu0
  %v888 = vadd.f32 0.0, %v887
  %v889 = vpop.f32.mrf.mxu0
  %v890 = vadd.f32 0.0, %v889
  %891 = vmatmul.bf16.gmra.mxu0 %v847
  %v892 = vpop.f32.mrf.mxu0
  %v893 = vadd.f32 0.0, %v892
  %v894 = vpop.f32.mrf.mxu0
  %v895 = vadd.f32 0.0, %v894
  %896 = vmatmul.bf16.gmra.mxu0 %v848
  %v897 = vpop.f32.mrf.mxu0
  %v898 = vadd.f32 0.0, %v897
  %v899 = vpop.f32.mrf.mxu0
  %v900 = vadd.f32 0.0, %v899
  %901 = vmatmul.bf16.gmra.mxu0 %v849
  %v902 = vpop.f32.mrf.mxu0
  %v903 = vadd.f32 0.0, %v902
  %v904 = vpop.f32.mrf.mxu0
  %v905 = vadd.f32 0.0, %v904
  %906 = vdwg.mxu0
  %v907 = vmul.f32 %v868, %v46
  %v908 = vmul.f32 %v870, %v47
  %v909 = vmul.f32 %v873, %v48
  %v910 = vmul.f32 %v875, %v49
  %v911 = vmul.f32 %v878, %v50
  %v912 = vmul.f32 %v880, %v51
  %v913 = vmul.f32 %v883, %v52
  %v914 = vmul.f32 %v885, %v53
  %v915 = vmul.f32 %v888, %v54
  %v916 = vmul.f32 %v890, %v55
  %v917 = vmul.f32 %v893, %v56
  %v918 = vmul.f32 %v895, %v57
  %v919 = vmul.f32 %v898, %v58
  %v920 = vmul.f32 %v900, %v59
  %v921 = vmul.f32 %v903, %v60
  %v922 = vmul.f32 %v905, %v61
  %v923 = vadd.f32 %v907, %v908
  %v924 = vadd.f32 %v923, %v909
  %v925 = vadd.f32 %v924, %v910
  %v926 = vadd.f32 %v925, %v911
  %v927 = vadd.f32 %v926, %v912
  %v928 = vadd.f32 %v927, %v913
  %v929 = vadd.f32 %v928, %v914
  %v930 = vadd.f32 %v929, %v915
  %v931 = vadd.f32 %v930, %v916
  %v932 = vadd.f32 %v931, %v917
  %v933 = vadd.f32 %v932, %v918
  %v934 = vadd.f32 %v933, %v919
  %v935 = vadd.f32 %v934, %v920
  %v936 = vadd.f32 %v935, %v921
  %v937 = vadd.f32 %v936, %v922
  %v938 = vrot.slane %v937, 4
  %v939 = vadd.f32 %v937, %v938
  %v940 = vrot.slane %v939, 2
  %v941 = vadd.f32 %v939, %v940
  %v942 = vrot.slane %v941, 1
  %v943 = vadd.f32 %v941, %v942
  %v944 = vxor.u32 %v943, 2147483648
  %v945 = vmul.f32 %v944, 1.442695
  %v946 = vpow.pop %v945
  %v947 = vadd.f32 %v946, 1.0
  %v948 = vrcp.pop %v947
  %v949 = vmul.f32 %v947, %v948
  %v950 = vsub.f32 1.0, %v949
  %v951 = vmul.f32 %v948, %v950
  %v952 = vadd.f32 %v948, %v951
  %vm953 = vweird.f32 %v947
  %vm954 = vweird.f32 %v948
  %vm955 = vmor %vm953, %vm954
  %v956 = vsel %vm955, %v948, %v952
  %v957 = vand.u32 2147483647, %v947
  %vm958 = vcmp.eq.f32.partialorder %v957, 8.507059e+37
  %v959 = vand.u32 %v947, 2147483648
  %v960 = vor.u32 1.1754944e-38, %v959
  %v961 = vsel %vm958, %v960, %v956
  %v962 = vmul.f32 1.0, %v961
  %963 = vst [vmem:[%s3 + $0x4] sm:$0x1] %v962
  %s964 = scalar_lea.vmem %s2, 320
  %v965 = vld [vmem:[%s964] sm:$0xf]
  %v966 = vld [vmem:[%s964 + $0x4] sm:$0xf]
  %v967 = vld [vmem:[%s964 + $0x8] sm:$0xf]
  %v968 = vld [vmem:[%s964 + $0xc] sm:$0xf]
  %v969 = vld [vmem:[%s964 + $0x10] sm:$0xf]
  %v970 = vld [vmem:[%s964 + $0x14] sm:$0xf]
  %v971 = vld [vmem:[%s964 + $0x18] sm:$0xf]
  %v972 = vld [vmem:[%s964 + $0x1c] sm:$0xf]
  %v973 = vld [vmem:[%s964 + $0x20] sm:$0xf]
  %v974 = vld [vmem:[%s964 + $0x24] sm:$0xf]
  %v975 = vld [vmem:[%s964 + $0x28] sm:$0xf]
  %v976 = vld [vmem:[%s964 + $0x2c] sm:$0xf]
  %v977 = vld [vmem:[%s964 + $0x30] sm:$0xf]
  %v978 = vld [vmem:[%s964 + $0x34] sm:$0xf]
  %v979 = vld [vmem:[%s964 + $0x38] sm:$0xf]
  %v980 = vld [vmem:[%s964 + $0x3c] sm:$0xf]
  %v997 = vunpack.c.l.b16 %v965
  %v998 = vunpack.c.l.b16 %v966
  %v999 = vunpack.c.l.b16 %v967
  %v1000 = vunpack.c.l.b16 %v968
  %v1001 = vunpack.c.l.b16 %v969
  %v1002 = vunpack.c.l.b16 %v970
  %v1003 = vunpack.c.l.b16 %v971
  %v1004 = vunpack.c.l.b16 %v972
  %v1005 = vunpack.c.l.b16 %v973
  %v1006 = vunpack.c.l.b16 %v974
  %v1007 = vunpack.c.l.b16 %v975
  %v1008 = vunpack.c.l.b16 %v976
  %v1009 = vunpack.c.l.b16 %v977
  %v1010 = vunpack.c.l.b16 %v978
  %v1011 = vunpack.c.l.b16 %v979
  %v1012 = vunpack.c.l.b16 %v980
  %v1013 = vpack.c.b16 %v998, %v997
  %v1014 = vpack.c.b16 %v1000, %v999
  %v1015 = vpack.c.b16 %v1002, %v1001
  %v1016 = vpack.c.b16 %v1004, %v1003
  %v1017 = vpack.c.b16 %v1006, %v1005
  %v1018 = vpack.c.b16 %v1008, %v1007
  %v1019 = vpack.c.b16 %v1010, %v1009
  %v1020 = vpack.c.b16 %v1012, %v1011
  %1029 = vmatpush.bf16.msra.mxu0 %v165
  %1030 = vmatpush.bf16.msra.mxu0 %v164
  %1031 = vmatpush.bf16.msra.mxu0 %v163
  %1032 = vmatpush.bf16.msra.mxu0 %v162
  %1033 = vmatpush.bf16.msra.mxu0 %v161
  %1034 = vmatpush.bf16.msra.mxu0 %v160
  %1035 = vmatpush.bf16.msra.mxu0 %v159
  %1036 = vmatpush.bf16.msra.mxu0 %v158
  %1037 = vmatmul.bf16.gmra.mxu0 %v1013
  %v1038 = vpop.f32.mrf.mxu0
  %v1039 = vadd.f32 0.0, %v1038
  %v1040 = vpop.f32.mrf.mxu0
  %v1041 = vadd.f32 0.0, %v1040
  %1042 = vmatmul.bf16.gmra.mxu0 %v1014
  %v1043 = vpop.f32.mrf.mxu0
  %v1044 = vadd.f32 0.0, %v1043
  %v1045 = vpop.f32.mrf.mxu0
  %v1046 = vadd.f32 0.0, %v1045
  %1047 = vmatmul.bf16.gmra.mxu0 %v1015
  %v1048 = vpop.f32.mrf.mxu0
  %v1049 = vadd.f32 0.0, %v1048
  %v1050 = vpop.f32.mrf.mxu0
  %v1051 = vadd.f32 0.0, %v1050
  %1052 = vmatmul.bf16.gmra.mxu0 %v1016
  %v1053 = vpop.f32.mrf.mxu0
  %v1054 = vadd.f32 0.0, %v1053
  %v1055 = vpop.f32.mrf.mxu0
  %v1056 = vadd.f32 0.0, %v1055
  %1057 = vmatmul.bf16.gmra.mxu0 %v1017
  %v1058 = vpop.f32.mrf.mxu0
  %v1059 = vadd.f32 0.0, %v1058
  %v1060 = vpop.f32.mrf.mxu0
  %v1061 = vadd.f32 0.0, %v1060
  %1062 = vmatmul.bf16.gmra.mxu0 %v1018
  %v1063 = vpop.f32.mrf.mxu0
  %v1064 = vadd.f32 0.0, %v1063
  %v1065 = vpop.f32.mrf.mxu0
  %v1066 = vadd.f32 0.0, %v1065
  %1067 = vmatmul.bf16.gmra.mxu0 %v1019
  %v1068 = vpop.f32.mrf.mxu0
  %v1069 = vadd.f32 0.0, %v1068
  %v1070 = vpop.f32.mrf.mxu0
  %v1071 = vadd.f32 0.0, %v1070
  %1072 = vmatmul.bf16.gmra.mxu0 %v1020
  %v1073 = vpop.f32.mrf.mxu0
  %v1074 = vadd.f32 0.0, %v1073
  %v1075 = vpop.f32.mrf.mxu0
  %v1076 = vadd.f32 0.0, %v1075
  %1077 = vdwg.mxu0
  %v1078 = vmul.f32 %v1039, %v46
  %v1079 = vmul.f32 %v1041, %v47
  %v1080 = vmul.f32 %v1044, %v48
  %v1081 = vmul.f32 %v1046, %v49
  %v1082 = vmul.f32 %v1049, %v50
  %v1083 = vmul.f32 %v1051, %v51
  %v1084 = vmul.f32 %v1054, %v52
  %v1085 = vmul.f32 %v1056, %v53
  %v1086 = vmul.f32 %v1059, %v54
  %v1087 = vmul.f32 %v1061, %v55
  %v1088 = vmul.f32 %v1064, %v56
  %v1089 = vmul.f32 %v1066, %v57
  %v1090 = vmul.f32 %v1069, %v58
  %v1091 = vmul.f32 %v1071, %v59
  %v1092 = vmul.f32 %v1074, %v60
  %v1093 = vmul.f32 %v1076, %v61
  %v1094 = vadd.f32 %v1078, %v1079
  %v1095 = vadd.f32 %v1094, %v1080
  %v1096 = vadd.f32 %v1095, %v1081
  %v1097 = vadd.f32 %v1096, %v1082
  %v1098 = vadd.f32 %v1097, %v1083
  %v1099 = vadd.f32 %v1098, %v1084
  %v1100 = vadd.f32 %v1099, %v1085
  %v1101 = vadd.f32 %v1100, %v1086
  %v1102 = vadd.f32 %v1101, %v1087
  %v1103 = vadd.f32 %v1102, %v1088
  %v1104 = vadd.f32 %v1103, %v1089
  %v1105 = vadd.f32 %v1104, %v1090
  %v1106 = vadd.f32 %v1105, %v1091
  %v1107 = vadd.f32 %v1106, %v1092
  %v1108 = vadd.f32 %v1107, %v1093
  %v1109 = vrot.slane %v1108, 4
  %v1110 = vadd.f32 %v1108, %v1109
  %v1111 = vrot.slane %v1110, 2
  %v1112 = vadd.f32 %v1110, %v1111
  %v1113 = vrot.slane %v1112, 1
  %v1114 = vadd.f32 %v1112, %v1113
  %v1115 = vxor.u32 %v1114, 2147483648
  %v1116 = vmul.f32 %v1115, 1.442695
  %v1117 = vpow.pop %v1116
  %v1118 = vadd.f32 %v1117, 1.0
  %v1119 = vrcp.pop %v1118
  %v1120 = vmul.f32 %v1118, %v1119
  %v1121 = vsub.f32 1.0, %v1120
  %v1122 = vmul.f32 %v1119, %v1121
  %v1123 = vadd.f32 %v1119, %v1122
  %vm1124 = vweird.f32 %v1118
  %vm1125 = vweird.f32 %v1119
  %vm1126 = vmor %vm1124, %vm1125
  %v1127 = vsel %vm1126, %v1119, %v1123
  %v1128 = vand.u32 2147483647, %v1118
  %vm1129 = vcmp.eq.f32.partialorder %v1128, 8.507059e+37
  %v1130 = vand.u32 %v1118, 2147483648
  %v1131 = vor.u32 1.1754944e-38, %v1130
  %v1132 = vsel %vm1129, %v1131, %v1127
  %v1133 = vmul.f32 1.0, %v1132
  %1134 = vst [vmem:[%s3 + $0x5] sm:$0x1] %v1133
  %s1135 = scalar_lea.vmem %s2, 384
  %v1136 = vld [vmem:[%s1135] sm:$0xf]
  %v1137 = vld [vmem:[%s1135 + $0x4] sm:$0xf]
  %v1138 = vld [vmem:[%s1135 + $0x8] sm:$0xf]
  %v1139 = vld [vmem:[%s1135 + $0xc] sm:$0xf]
  %v1140 = vld [vmem:[%s1135 + $0x10] sm:$0xf]
  %v1141 = vld [vmem:[%s1135 + $0x14] sm:$0xf]
  %v1142 = vld [vmem:[%s1135 + $0x18] sm:$0xf]
  %v1143 = vld [vmem:[%s1135 + $0x1c] sm:$0xf]
  %v1144 = vld [vmem:[%s1135 + $0x20] sm:$0xf]
  %v1145 = vld [vmem:[%s1135 + $0x24] sm:$0xf]
  %v1146 = vld [vmem:[%s1135 + $0x28] sm:$0xf]
  %v1147 = vld [vmem:[%s1135 + $0x2c] sm:$0xf]
  %v1148 = vld [vmem:[%s1135 + $0x30] sm:$0xf]
  %v1149 = vld [vmem:[%s1135 + $0x34] sm:$0xf]
  %v1150 = vld [vmem:[%s1135 + $0x38] sm:$0xf]
  %v1151 = vld [vmem:[%s1135 + $0x3c] sm:$0xf]
  %v1168 = vunpack.c.l.b16 %v1136
  %v1169 = vunpack.c.l.b16 %v1137
  %v1170 = vunpack.c.l.b16 %v1138
  %v1171 = vunpack.c.l.b16 %v1139
  %v1172 = vunpack.c.l.b16 %v1140
  %v1173 = vunpack.c.l.b16 %v1141
  %v1174 = vunpack.c.l.b16 %v1142
  %v1175 = vunpack.c.l.b16 %v1143
  %v1176 = vunpack.c.l.b16 %v1144
  %v1177 = vunpack.c.l.b16 %v1145
  %v1178 = vunpack.c.l.b16 %v1146
  %v1179 = vunpack.c.l.b16 %v1147
  %v1180 = vunpack.c.l.b16 %v1148
  %v1181 = vunpack.c.l.b16 %v1149
  %v1182 = vunpack.c.l.b16 %v1150
  %v1183 = vunpack.c.l.b16 %v1151
  %v1184 = vpack.c.b16 %v1169, %v1168
  %v1185 = vpack.c.b16 %v1171, %v1170
  %v1186 = vpack.c.b16 %v1173, %v1172
  %v1187 = vpack.c.b16 %v1175, %v1174
  %v1188 = vpack.c.b16 %v1177, %v1176
  %v1189 = vpack.c.b16 %v1179, %v1178
  %v1190 = vpack.c.b16 %v1181, %v1180
  %v1191 = vpack.c.b16 %v1183, %v1182
  %1200 = vmatpush.bf16.msra.mxu0 %v165
  %1201 = vmatpush.bf16.msra.mxu0 %v164
  %1202 = vmatpush.bf16.msra.mxu0 %v163
  %1203 = vmatpush.bf16.msra.mxu0 %v162
  %1204 = vmatpush.bf16.msra.mxu0 %v161
  %1205 = vmatpush.bf16.msra.mxu0 %v160
  %1206 = vmatpush.bf16.msra.mxu0 %v159
  %1207 = vmatpush.bf16.msra.mxu0 %v158
  %1208 = vmatmul.bf16.gmra.mxu0 %v1184
  %v1209 = vpop.f32.mrf.mxu0
  %v1210 = vadd.f32 0.0, %v1209
  %v1211 = vpop.f32.mrf.mxu0
  %v1212 = vadd.f32 0.0, %v1211
  %1213 = vmatmul.bf16.gmra.mxu0 %v1185
  %v1214 = vpop.f32.mrf.mxu0
  %v1215 = vadd.f32 0.0, %v1214
  %v1216 = vpop.f32.mrf.mxu0
  %v1217 = vadd.f32 0.0, %v1216
  %1218 = vmatmul.bf16.gmra.mxu0 %v1186
  %v1219 = vpop.f32.mrf.mxu0
  %v1220 = vadd.f32 0.0, %v1219
  %v1221 = vpop.f32.mrf.mxu0
  %v1222 = vadd.f32 0.0, %v1221
  %1223 = vmatmul.bf16.gmra.mxu0 %v1187
  %v1224 = vpop.f32.mrf.mxu0
  %v1225 = vadd.f32 0.0, %v1224
  %v1226 = vpop.f32.mrf.mxu0
  %v1227 = vadd.f32 0.0, %v1226
  %1228 = vmatmul.bf16.gmra.mxu0 %v1188
  %v1229 = vpop.f32.mrf.mxu0
  %v1230 = vadd.f32 0.0, %v1229
  %v1231 = vpop.f32.mrf.mxu0
  %v1232 = vadd.f32 0.0, %v1231
  %1233 = vmatmul.bf16.gmra.mxu0 %v1189
  %v1234 = vpop.f32.mrf.mxu0
  %v1235 = vadd.f32 0.0, %v1234
  %v1236 = vpop.f32.mrf.mxu0
  %v1237 = vadd.f32 0.0, %v1236
  %1238 = vmatmul.bf16.gmra.mxu0 %v1190
  %v1239 = vpop.f32.mrf.mxu0
  %v1240 = vadd.f32 0.0, %v1239
  %v1241 = vpop.f32.mrf.mxu0
  %v1242 = vadd.f32 0.0, %v1241
  %1243 = vmatmul.bf16.gmra.mxu0 %v1191
  %v1244 = vpop.f32.mrf.mxu0
  %v1245 = vadd.f32 0.0, %v1244
  %v1246 = vpop.f32.mrf.mxu0
  %v1247 = vadd.f32 0.0, %v1246
  %1248 = vdwg.mxu0
  %v1249 = vmul.f32 %v1210, %v46
  %v1250 = vmul.f32 %v1212, %v47
  %v1251 = vmul.f32 %v1215, %v48
  %v1252 = vmul.f32 %v1217, %v49
  %v1253 = vmul.f32 %v1220, %v50
  %v1254 = vmul.f32 %v1222, %v51
  %v1255 = vmul.f32 %v1225, %v52
  %v1256 = vmul.f32 %v1227, %v53
  %v1257 = vmul.f32 %v1230, %v54
  %v1258 = vmul.f32 %v1232, %v55
  %v1259 = vmul.f32 %v1235, %v56
  %v1260 = vmul.f32 %v1237, %v57
  %v1261 = vmul.f32 %v1240, %v58
  %v1262 = vmul.f32 %v1242, %v59
  %v1263 = vmul.f32 %v1245, %v60
  %v1264 = vmul.f32 %v1247, %v61
  %v1265 = vadd.f32 %v1249, %v1250
  %v1266 = vadd.f32 %v1265, %v1251
  %v1267 = vadd.f32 %v1266, %v1252
  %v1268 = vadd.f32 %v1267, %v1253
  %v1269 = vadd.f32 %v1268, %v1254
  %v1270 = vadd.f32 %v1269, %v1255
  %v1271 = vadd.f32 %v1270, %v1256
  %v1272 = vadd.f32 %v1271, %v1257
  %v1273 = vadd.f32 %v1272, %v1258
  %v1274 = vadd.f32 %v1273, %v1259
  %v1275 = vadd.f32 %v1274, %v1260
  %v1276 = vadd.f32 %v1275, %v1261
  %v1277 = vadd.f32 %v1276, %v1262
  %v1278 = vadd.f32 %v1277, %v1263
  %v1279 = vadd.f32 %v1278, %v1264
  %v1280 = vrot.slane %v1279, 4
  %v1281 = vadd.f32 %v1279, %v1280
  %v1282 = vrot.slane %v1281, 2
  %v1283 = vadd.f32 %v1281, %v1282
  %v1284 = vrot.slane %v1283, 1
  %v1285 = vadd.f32 %v1283, %v1284
  %v1286 = vxor.u32 %v1285, 2147483648
  %v1287 = vmul.f32 %v1286, 1.442695
  %v1288 = vpow.pop %v1287
  %v1289 = vadd.f32 %v1288, 1.0
  %v1290 = vrcp.pop %v1289
  %v1291 = vmul.f32 %v1289, %v1290
  %v1292 = vsub.f32 1.0, %v1291
  %v1293 = vmul.f32 %v1290, %v1292
  %v1294 = vadd.f32 %v1290, %v1293
  %vm1295 = vweird.f32 %v1289
  %vm1296 = vweird.f32 %v1290
  %vm1297 = vmor %vm1295, %vm1296
  %v1298 = vsel %vm1297, %v1290, %v1294
  %v1299 = vand.u32 2147483647, %v1289
  %vm1300 = vcmp.eq.f32.partialorder %v1299, 8.507059e+37
  %v1301 = vand.u32 %v1289, 2147483648
  %v1302 = vor.u32 1.1754944e-38, %v1301
  %v1303 = vsel %vm1300, %v1302, %v1298
  %v1304 = vmul.f32 1.0, %v1303
  %1305 = vst [vmem:[%s3 + $0x6] sm:$0x1] %v1304
  %s1306 = scalar_lea.vmem %s2, 448
  %v1307 = vld [vmem:[%s1306] sm:$0xf]
  %v1308 = vld [vmem:[%s1306 + $0x4] sm:$0xf]
  %v1309 = vld [vmem:[%s1306 + $0x8] sm:$0xf]
  %v1310 = vld [vmem:[%s1306 + $0xc] sm:$0xf]
  %v1311 = vld [vmem:[%s1306 + $0x10] sm:$0xf]
  %v1312 = vld [vmem:[%s1306 + $0x14] sm:$0xf]
  %v1313 = vld [vmem:[%s1306 + $0x18] sm:$0xf]
  %v1314 = vld [vmem:[%s1306 + $0x1c] sm:$0xf]
  %v1315 = vld [vmem:[%s1306 + $0x20] sm:$0xf]
  %v1316 = vld [vmem:[%s1306 + $0x24] sm:$0xf]
  %v1317 = vld [vmem:[%s1306 + $0x28] sm:$0xf]
  %v1318 = vld [vmem:[%s1306 + $0x2c] sm:$0xf]
  %v1319 = vld [vmem:[%s1306 + $0x30] sm:$0xf]
  %v1320 = vld [vmem:[%s1306 + $0x34] sm:$0xf]
  %v1321 = vld [vmem:[%s1306 + $0x38] sm:$0xf]
  %v1322 = vld [vmem:[%s1306 + $0x3c] sm:$0xf]
  %v1339 = vunpack.c.l.b16 %v1307
  %v1340 = vunpack.c.l.b16 %v1308
  %v1341 = vunpack.c.l.b16 %v1309
  %v1342 = vunpack.c.l.b16 %v1310
  %v1343 = vunpack.c.l.b16 %v1311
  %v1344 = vunpack.c.l.b16 %v1312
  %v1345 = vunpack.c.l.b16 %v1313
  %v1346 = vunpack.c.l.b16 %v1314
  %v1347 = vunpack.c.l.b16 %v1315
  %v1348 = vunpack.c.l.b16 %v1316
  %v1349 = vunpack.c.l.b16 %v1317
  %v1350 = vunpack.c.l.b16 %v1318
  %v1351 = vunpack.c.l.b16 %v1319
  %v1352 = vunpack.c.l.b16 %v1320
  %v1353 = vunpack.c.l.b16 %v1321
  %v1354 = vunpack.c.l.b16 %v1322
  %v1355 = vpack.c.b16 %v1340, %v1339
  %v1356 = vpack.c.b16 %v1342, %v1341
  %v1357 = vpack.c.b16 %v1344, %v1343
  %v1358 = vpack.c.b16 %v1346, %v1345
  %v1359 = vpack.c.b16 %v1348, %v1347
  %v1360 = vpack.c.b16 %v1350, %v1349
  %v1361 = vpack.c.b16 %v1352, %v1351
  %v1362 = vpack.c.b16 %v1354, %v1353
  %1371 = vmatpush.bf16.msra.mxu0 %v165
  %1372 = vmatpush.bf16.msra.mxu0 %v164
  %1373 = vmatpush.bf16.msra.mxu0 %v163
  %1374 = vmatpush.bf16.msra.mxu0 %v162
  %1375 = vmatpush.bf16.msra.mxu0 %v161
  %1376 = vmatpush.bf16.msra.mxu0 %v160
  %1377 = vmatpush.bf16.msra.mxu0 %v159
  %1378 = vmatpush.bf16.msra.mxu0 %v158
  %1379 = vmatmul.bf16.gmra.mxu0 %v1355
  %v1380 = vpop.f32.mrf.mxu0
  %v1381 = vadd.f32 0.0, %v1380
  %v1382 = vpop.f32.mrf.mxu0
  %v1383 = vadd.f32 0.0, %v1382
  %1384 = vmatmul.bf16.gmra.mxu0 %v1356
  %v1385 = vpop.f32.mrf.mxu0
  %v1386 = vadd.f32 0.0, %v1385
  %v1387 = vpop.f32.mrf.mxu0
  %v1388 = vadd.f32 0.0, %v1387
  %1389 = vmatmul.bf16.gmra.mxu0 %v1357
  %v1390 = vpop.f32.mrf.mxu0
  %v1391 = vadd.f32 0.0, %v1390
  %v1392 = vpop.f32.mrf.mxu0
  %v1393 = vadd.f32 0.0, %v1392
  %1394 = vmatmul.bf16.gmra.mxu0 %v1358
  %v1395 = vpop.f32.mrf.mxu0
  %v1396 = vadd.f32 0.0, %v1395
  %v1397 = vpop.f32.mrf.mxu0
  %v1398 = vadd.f32 0.0, %v1397
  %1399 = vmatmul.bf16.gmra.mxu0 %v1359
  %v1400 = vpop.f32.mrf.mxu0
  %v1401 = vadd.f32 0.0, %v1400
  %v1402 = vpop.f32.mrf.mxu0
  %v1403 = vadd.f32 0.0, %v1402
  %1404 = vmatmul.bf16.gmra.mxu0 %v1360
  %v1405 = vpop.f32.mrf.mxu0
  %v1406 = vadd.f32 0.0, %v1405
  %v1407 = vpop.f32.mrf.mxu0
  %v1408 = vadd.f32 0.0, %v1407
  %1409 = vmatmul.bf16.gmra.mxu0 %v1361
  %v1410 = vpop.f32.mrf.mxu0
  %v1411 = vadd.f32 0.0, %v1410
  %v1412 = vpop.f32.mrf.mxu0
  %v1413 = vadd.f32 0.0, %v1412
  %1414 = vmatmul.bf16.gmra.mxu0 %v1362
  %v1415 = vpop.f32.mrf.mxu0
  %v1416 = vadd.f32 0.0, %v1415
  %v1417 = vpop.f32.mrf.mxu0
  %v1418 = vadd.f32 0.0, %v1417
  %1419 = vdwg.mxu0
  %v1420 = vmul.f32 %v1381, %v46
  %v1421 = vmul.f32 %v1383, %v47
  %v1422 = vmul.f32 %v1386, %v48
  %v1423 = vmul.f32 %v1388, %v49
  %v1424 = vmul.f32 %v1391, %v50
  %v1425 = vmul.f32 %v1393, %v51
  %v1426 = vmul.f32 %v1396, %v52
  %v1427 = vmul.f32 %v1398, %v53
  %v1428 = vmul.f32 %v1401, %v54
  %v1429 = vmul.f32 %v1403, %v55
  %v1430 = vmul.f32 %v1406, %v56
  %v1431 = vmul.f32 %v1408, %v57
  %v1432 = vmul.f32 %v1411, %v58
  %v1433 = vmul.f32 %v1413, %v59
  %v1434 = vmul.f32 %v1416, %v60
  %v1435 = vmul.f32 %v1418, %v61
  %v1436 = vadd.f32 %v1420, %v1421
  %v1437 = vadd.f32 %v1436, %v1422
  %v1438 = vadd.f32 %v1437, %v1423
  %v1439 = vadd.f32 %v1438, %v1424
  %v1440 = vadd.f32 %v1439, %v1425
  %v1441 = vadd.f32 %v1440, %v1426
  %v1442 = vadd.f32 %v1441, %v1427
  %v1443 = vadd.f32 %v1442, %v1428
  %v1444 = vadd.f32 %v1443, %v1429
  %v1445 = vadd.f32 %v1444, %v1430
  %v1446 = vadd.f32 %v1445, %v1431
  %v1447 = vadd.f32 %v1446, %v1432
  %v1448 = vadd.f32 %v1447, %v1433
  %v1449 = vadd.f32 %v1448, %v1434
  %v1450 = vadd.f32 %v1449, %v1435
  %v1451 = vrot.slane %v1450, 4
  %v1452 = vadd.f32 %v1450, %v1451
  %v1453 = vrot.slane %v1452, 2
  %v1454 = vadd.f32 %v1452, %v1453
  %v1455 = vrot.slane %v1454, 1
  %v1456 = vadd.f32 %v1454, %v1455
  %v1457 = vxor.u32 %v1456, 2147483648
  %v1458 = vmul.f32 %v1457, 1.442695
  %v1459 = vpow.pop %v1458
  %v1460 = vadd.f32 %v1459, 1.0
  %v1461 = vrcp.pop %v1460
  %v1462 = vmul.f32 %v1460, %v1461
  %v1463 = vsub.f32 1.0, %v1462
  %v1464 = vmul.f32 %v1461, %v1463
  %v1465 = vadd.f32 %v1461, %v1464
  %vm1466 = vweird.f32 %v1460
  %vm1467 = vweird.f32 %v1461
  %vm1468 = vmor %vm1466, %vm1467
  %v1469 = vsel %vm1468, %v1461, %v1465
  %v1470 = vand.u32 2147483647, %v1460
  %vm1471 = vcmp.eq.f32.partialorder %v1470, 8.507059e+37
  %v1472 = vand.u32 %v1460, 2147483648
  %v1473 = vor.u32 1.1754944e-38, %v1472
  %v1474 = vsel %vm1471, %v1473, %v1469
  %v1475 = vmul.f32 1.0, %v1474
  %1476 = vst [vmem:[%s3 + $0x7] sm:$0x1] %v1475
  // Predicated region
  $region14: #{ddi_decagon_prob_forward.5} parent=0 // pred_check
    _
  $region15: #{ddi_decagon_prob_forward.5} parent=0 // pred_check_branch
    %1478 = sbr.rel (0) target = $region17
  $region16: #{ddi_decagon_prob_forward.5} parent=0 // pred_region
    _
  $region17: #{ddi_decagon_prob_forward.5} parent=0 // pred_fallthru
    _
  // Predicated region
  $region18: #{ddi_decagon_prob_forward.5} parent=0 // pred_check
    _
  $region19: #{ddi_decagon_prob_forward.5} parent=0 // pred_check_branch
    %1480 = sbr.rel (0) target = $region21
  $region20: #{ddi_decagon_prob_forward.5} parent=0 // pred_region
    _
  $region21: #{ddi_decagon_prob_forward.5} parent=0 // pred_fallthru
    _

</llo_original>
